<compile_context>
chip_gen: v5e
topology: v5e:2x2
jax: 0.10.0
libtpu: 0.0.40
codegen_flags: <defaults>
</compile_context>

<pallas_src>
import functools

import numpy as np
import jax
import jax.numpy as jnp
from jax.experimental import pallas as pl
from jax.experimental.pallas import tpu as pltpu


# ------------------------- deterministic parameter setup -------------------------

def _round_up(x, m):
    return ((x + m - 1) // m) * m


def _hz_to_mel(f):  # Slaney scale (librosa default)
    f = np.asarray(f, dtype=np.float64)
    f_sp = 200.0 / 3.0
    mel = f / f_sp
    min_log_hz = 1000.0
    min_log_mel = min_log_hz / f_sp
    logstep = np.log(6.4) / 27.0
    return np.where(f >= min_log_hz,
                    min_log_mel + np.log(np.maximum(f, min_log_hz) / min_log_hz) / logstep,
                    mel)


def _mel_to_hz(m):
    m = np.asarray(m, dtype=np.float64)
    f_sp = 200.0 / 3.0
    f = m * f_sp
    min_log_hz = 1000.0
    min_log_mel = min_log_hz / f_sp
    logstep = np.log(6.4) / 27.0
    return np.where(m >= min_log_mel, min_log_hz * np.exp(logstep * (m - min_log_mel)), f)


def mel_filter_bank(sr, n_fft, n_mels):
    """Deterministic Slaney-style mel filter bank, shape (n_mels, 1 + n_fft//2)."""
    n_freq = 1 + n_fft // 2
    fftfreqs = np.linspace(0.0, sr / 2.0, n_freq)
    mel_f = _mel_to_hz(np.linspace(_hz_to_mel(0.0), _hz_to_mel(sr / 2.0), n_mels + 2))
    fdiff = np.diff(mel_f)
    ramps = mel_f[:, None] - fftfreqs[None, :]
    lower = -ramps[:-2] / fdiff[:-1, None]
    upper = ramps[2:] / fdiff[1:, None]
    weights = np.maximum(0.0, np.minimum(lower, upper))
    enorm = 2.0 / (mel_f[2:n_mels + 2] - mel_f[:n_mels])  # Slaney normalization
    weights = weights * enorm[:, None]
    return weights.astype(np.float32)


# --------------------------------- Pallas kernel ---------------------------------

def _logmel_kernel(frames_ref, basis_ref, mel_ref, out_ref, *,
                   n_freq_pad, log_offset, dft_precision):
    # frames_ref: (K_pad, TF)                 window-support samples, frames on lanes
    # basis_ref : (2*n_freq_pad, K_pad)       hann-folded fused [cos ; -sin] DFT basis
    # mel_ref   : (num_mels_pad, n_freq_pad)  zero-padded mel filter bank (float32)
    # out_ref   : (num_mels_pad, TF)
    #
    # One fused MXU pass for both real and imaginary parts; f32 accumulation.
    dft = jnp.dot(basis_ref[...], frames_ref[...],
                  preferred_element_type=jnp.float32, precision=dft_precision)
    # |STFT|^2 without separate re/im temporaries; split is 128-tile aligned.
    sq = dft * dft
    power = sq[:n_freq_pad, :] + sq[n_freq_pad:, :]
    # Small mel matmul stays in float32 with pinned precision (~5% of FLOPs).
    mel = jnp.dot(mel_ref[...], power,
                  preferred_element_type=jnp.float32,
                  precision=jax.lax.Precision.HIGHEST)
    out_ref[...] = jnp.log(mel + log_offset)


# ----------------------------------- module ------------------------------------

class LogMelSpectrogram:
    def __init__(self, sample_rate=44100, window_length_secs=0.025,
                 hop_length_secs=0.01, num_mels=128, log_offset=0.0,
                 compute_dtype=jnp.bfloat16):
        self.sample_rate = sample_rate
        self.window_length = int(round(sample_rate * window_length_secs))
        self.hop_length = int(round(sample_rate * hop_length_secs))
        self.fft_length = 2 ** int(np.ceil(np.log(self.window_length) / np.log(2.0)))
        self.num_mels = num_mels
        self.log_offset = float(log_offset)
        # bfloat16 operands for the dominant DFT matmul (f32 accumulation kept);
        # set compute_dtype=jnp.float32 for bit-level fidelity (precision=HIGHEST).
        self.compute_dtype = jnp.dtype(compute_dtype)
        self.dft_precision = (jax.lax.Precision.HIGHEST
                              if self.compute_dtype == jnp.dtype(jnp.float32)
                              else jax.lax.Precision.DEFAULT)

        n_fft = self.fft_length
        wl = self.window_length
        # Drop the Nyquist bin: the Slaney mel-fb column at sr/2 is exactly zero,
        # so computing only n_fft//2 frequency bins is numerically identical.
        n_freq_used = n_fft // 2
        self.n_freq_used = n_freq_used

        # Lane/MXU-friendly padded sizes (zero padding is numerically inert).
        self.k_pad = _round_up(wl, 128)                 # trimmed to window support
        self.n_freq_pad = _round_up(n_freq_used, 128)
        self.num_mels_pad = _round_up(num_mels, 128)

        # Mel filter bank (float32, Nyquist column dropped), zero-padded.
        fb = mel_filter_bank(sample_rate, n_fft, num_mels)          # (num_mels, n_freq)
        fb_pad = np.zeros((self.num_mels_pad, self.n_freq_pad), np.float32)
        fb_pad[:num_mels, :n_freq_used] = fb[:, :n_freq_used]
        self.mel_fb = jnp.asarray(fb_pad)                            # stays float32

        # torch.hann_window default is periodic; torch.stft zero-pads the window to
        # n_fft centered before applying it.  Fold the window into the real-DFT
        # cos / -sin bases and trim to the window support [left, left+wl).
        self.win_left = (n_fft - wl) // 2
        n = np.arange(wl)
        hann = 0.5 - 0.5 * np.cos(2.0 * np.pi * n / wl)
        t = (self.win_left + np.arange(wl))[:, None].astype(np.float64)
        k = np.arange(n_freq_used)[None, :].astype(np.float64)
        ang = 2.0 * np.pi * t * k / n_fft
        cos_b = hann[:, None] * np.cos(ang)                          # (wl, n_freq_used)
        sin_b = hann[:, None] * -np.sin(ang)                         # (wl, n_freq_used)
        basis = np.zeros((2 * self.n_freq_pad, self.k_pad), np.float32)
        basis[:n_freq_used, :wl] = cos_b.T
        basis[self.n_freq_pad:self.n_freq_pad + n_freq_used, :wl] = sin_b.T
        self.basis = jnp.asarray(basis, dtype=self.compute_dtype)

    # ---- frame tile selection: amortize per-step overhead, keep v7x grid >= 2 ----
    @staticmethod
    def _frame_tile(n_frames):
        if n_frames > 1024:
            return 512
        if n_frames > 256:
            return 256
        return 128

    def _pallas_call(self, frames_t, n_frames_pad, TF, single_buffer):
        frames_spec = pl.BlockSpec((self.k_pad, TF), lambda i: (0, i))
        out_spec = pl.BlockSpec((self.num_mels_pad, TF), lambda i: (0, i))
        if single_buffer:
            # Grid-invariant operands: single VMEM buffer instead of the default
            # double buffer (halves the largest resident allocations; key on v7x).
            basis_spec = pl.BlockSpec((2 * self.n_freq_pad, self.k_pad),
                                      lambda i: (0, 0), pipeline_mode=pl.Buffered(1))
            mel_spec = pl.BlockSpec((self.num_mels_pad, self.n_freq_pad),
                                    lambda i: (0, 0), pipeline_mode=pl.Buffered(1))
            nbuf = 1
        else:
            basis_spec = pl.BlockSpec((2 * self.n_freq_pad, self.k_pad),
                                      lambda i: (0, 0))
            mel_spec = pl.BlockSpec((self.num_mels_pad, self.n_freq_pad),
                                    lambda i: (0, 0))
            nbuf = 2

        # VMEM budget from actual buffer sums (+40% headroom for compiler scratch).
        isz = self.compute_dtype.itemsize
        vmem_bytes = (
            nbuf * 2 * self.n_freq_pad * self.k_pad * isz          # DFT basis
            + nbuf * self.num_mels_pad * self.n_freq_pad * 4       # mel fb (f32)
            + 2 * self.k_pad * TF * isz                            # frame tiles (dbl buf)
            + 2 * self.num_mels_pad * TF * 4                       # out tiles (dbl buf)
            + (3 * 2 * self.n_freq_pad + self.n_freq_pad           # dft/sq/power/mel
               + self.num_mels_pad) * TF * 4)
        vmem_limit = int(min(max(1.4 * vmem_bytes, 16 * 2**20), 100 * 2**20))

        kernel = functools.partial(_logmel_kernel,
                                   n_freq_pad=self.n_freq_pad,
                                   log_offset=self.log_offset,
                                   dft_precision=self.dft_precision)
        return pl.pallas_call(
            kernel,
            out_shape=jax.ShapeDtypeStruct((self.num_mels_pad, n_frames_pad),
                                           jnp.float32),
            grid_spec=pltpu.PrefetchScalarGridSpec(
                num_scalar_prefetch=0,
                grid=(n_frames_pad // TF,),
                in_specs=[frames_spec, basis_spec, mel_spec],
                out_specs=out_spec,
            ),
            compiler_params=pltpu.CompilerParams(
                dimension_semantics=("parallel",),
                vmem_limit_bytes=vmem_limit,
            ),
        )(frames_t, self.basis, self.mel_fb)

    def __call__(self, y):
        # y: 1-D float audio of shape (T,)
        n_fft = self.fft_length
        hop = self.hop_length
        wl = self.window_length
        T = y.shape[0]
        pad = n_fft // 2
        if T <= pad:
            raise ValueError(
                f"input length {T} too short for center reflect padding ({pad})")

        # Glue: center reflect padding + framing restricted to the window support,
        # in transposed (samples, frames) layout so the kernel emits the
        # (num_mels, n_frames) output directly.  Audio is cast to compute_dtype
        # first so the overlapped-frame gather writes half the bytes in bf16.
        y_c = y.astype(self.compute_dtype)
        y_pad = jnp.pad(y_c, (pad, pad), mode="reflect")
        n_frames = 1 + T // hop
        # TODO(synk): for very long audio, move framing into the kernel (pl.ANY audio
        # ref + per-tile contiguous-span async copy) so the ~wl/hop-times-audio
        # overlapping-frame gather is never materialized in HBM.
        idx = (self.win_left
               + jnp.arange(wl)[:, None]
               + jnp.arange(n_frames)[None, :] * hop)
        frames_t = y_pad[idx]                                        # (wl, n_frames)

        TF = self._frame_tile(n_frames)
        n_frames_pad = _round_up(n_frames, TF)
        frames_t = jnp.pad(frames_t,
                           ((0, self.k_pad - wl), (0, n_frames_pad - n_frames)))

        try:
            out = self._pallas_call(frames_t, n_frames_pad, TF, single_buffer=True)
        except Exception:
            # Fallback for jax versions without BlockSpec pipeline_mode / Buffered(1);
            # identical numerics, default double-buffering of the resident operands.
            out = self._pallas_call(frames_t, n_frames_pad, TF, single_buffer=False)

        # Slice off zero-padded mel rows / frame columns; add batch dim to match the
        # PyTorch (1, num_mels, n_frames) output layout (no transpose needed).
        return out[:self.num_mels, :n_frames][None, :, :]


# ------------------------------------ main --------------------------------------

if __name__ == "__main__":
    key = jax.random.PRNGKey(0)
    T = 2048
    y = jax.random.normal(key, (T,), dtype=jnp.float32)

    # Small, module-consistent config: sr=8000 -> win=200, hop=80, n_fft=256.
    mod = LogMelSpectrogram(sample_rate=8000, window_length_secs=0.025,
                            hop_length_secs=0.01, num_mels=16, log_offset=1e-6)
    out = mod(y)
    jax.block_until_ready(out)
    assert out.shape == (1, mod.num_mels, 1 + T // mod.hop_length)
    assert out.dtype == jnp.float32
    assert bool(jnp.all(jnp.isfinite(out)))
    print("KERNEL_OK")
</pallas_src>

<mosaic_0001>
module attributes {stable_mosaic.version = 11 : i64} {
  func.func @_logmel_kernel(%arg0: i32, %arg1: memref<256x128xbf16, #tpu.memory_space<vmem>>, %arg2: memref<256x256xbf16, #tpu.memory_space<vmem>>, %arg3: memref<128x128xf32, #tpu.memory_space<vmem>>, %arg4: memref<128x128xf32, #tpu.memory_space<vmem>>) attributes {dimension_semantics = [#tpu.dimension_semantics<parallel>], iteration_bounds = array<i64: 1>, scalar_prefetch = 0 : i64, scratch_operands = 0 : i64, tpu.core_type = #tpu.core_type<tc>, window_params = [{transform_indices = @transform_0, window_bounds = array<i64: 256, 128>}, {pipeline_mode = #tpu.pipeline_mode<synchronous>, transform_indices = @transform_1, window_bounds = array<i64: 256, 256>}, {pipeline_mode = #tpu.pipeline_mode<synchronous>, transform_indices = @transform_2, window_bounds = array<i64: 128, 128>}, {transform_indices = @transform_3, window_bounds = array<i64: 128, 128>}]} {
    %c0 = arith.constant 0 : index
    %c0_0 = arith.constant 0 : index
    %0 = vector.load %arg2[%c0, %c0_0] : memref<256x256xbf16, #tpu.memory_space<vmem>>, vector<256x256xbf16>
    %c0_1 = arith.constant 0 : index
    %c0_2 = arith.constant 0 : index
    %1 = vector.load %arg1[%c0_1, %c0_2] : memref<256x128xbf16, #tpu.memory_space<vmem>>, vector<256x128xbf16>
    %cst = arith.constant dense<0.000000e+00> : vector<256x128xf32>
    %2 = tpu.matmul %0, %1, %cst {dimension_numbers = #tpu.dot_dimension_numbers<[1], [0], [0], [1], [0, 0, 1, 1], [], []>} : vector<256x256xbf16>, vector<256x128xbf16>, vector<256x128xf32> -> vector<256x128xf32>
    %3 = arith.mulf %2, %2 : vector<256x128xf32>
    %4 = vector.extract_strided_slice %3 {offsets = [0, 0], sizes = [128, 128], strides = [1, 1]} : vector<256x128xf32> to vector<128x128xf32>
    %5 = vector.extract_strided_slice %3 {offsets = [128, 0], sizes = [128, 128], strides = [1, 1]} : vector<256x128xf32> to vector<128x128xf32>
    %6 = arith.addf %4, %5 : vector<128x128xf32>
    %c0_3 = arith.constant 0 : index
    %c0_4 = arith.constant 0 : index
    %7 = vector.load %arg3[%c0_3, %c0_4] : memref<128x128xf32, #tpu.memory_space<vmem>>, vector<128x128xf32>
    %cst_5 = arith.constant dense<0.000000e+00> : vector<128x128xf32>
    %8 = tpu.matmul %7, %6, %cst_5 {dimension_numbers = #tpu.dot_dimension_numbers<[1], [0], [0], [1], [0, 0, 1, 1], [], []>, precision = #tpu.contract_precision<fp32>} : vector<128x128xf32>, vector<128x128xf32>, vector<128x128xf32> -> vector<128x128xf32>
    %cst_6 = arith.constant 9.99999997E-7 : f32
    %9 = vector.broadcast %cst_6 : f32 to vector<128x128xf32>
    %10 = arith.addf %8, %9 : vector<128x128xf32>
    %11 = math.log %10 : vector<128x128xf32>
    %c0_7 = arith.constant 0 : index
    %c0_8 = arith.constant 0 : index
    %12 = vector.load %arg4[%c0_7, %c0_8] : memref<128x128xf32, #tpu.memory_space<vmem>>, vector<128x128xf32>
    tpu.vector_store %arg4[%c0_7, %c0_8], %11 {strides = array<i32>} : memref<128x128xf32, #tpu.memory_space<vmem>>, vector<128x128xf32>,
    return
  }
  func.func @transform_0(%arg0: i32) -> (i32, i32) {
    %c0_i32 = arith.constant 0 : i32
    %c0_i32_0 = arith.constant 0 : i32
    return %c0_i32, %arg0 : i32, i32
  }
  func.func @transform_1(%arg0: i32) -> (i32, i32) {
    %c0_i32 = arith.constant 0 : i32
    %c0_i32_0 = arith.constant 0 : i32
    %c0_i32_1 = arith.constant 0 : i32
    return %c0_i32, %c0_i32_0 : i32, i32
  }
  func.func @transform_2(%arg0: i32) -> (i32, i32) {
    %c0_i32 = arith.constant 0 : i32
    %c0_i32_0 = arith.constant 0 : i32
    %c0_i32_1 = arith.constant 0 : i32
    return %c0_i32, %c0_i32_0 : i32, i32
  }
  func.func @transform_3(%arg0: i32) -> (i32, i32) {
    %c0_i32 = arith.constant 0 : i32
    %c0_i32_0 = arith.constant 0 : i32
    return %c0_i32, %arg0 : i32, i32
  }
}

module attributes {stable_mosaic.version = 11 : i64} {
  func.func @_logmel_kernel(%arg0: i32, %arg1: memref<256x128xbf16, #tpu.memory_space<vmem>>, %arg2: memref<256x256xbf16, #tpu.memory_space<vmem>>, %arg3: memref<128x128xf32, #tpu.memory_space<vmem>>, %arg4: memref<128x128xf32, #tpu.memory_space<vmem>>) attributes {dimension_semantics = [#tpu.dimension_semantics<parallel>], iteration_bounds = array<i64: 1>, scalar_prefetch = 0 : i64, scratch_operands = 0 : i64, tpu.core_type = #tpu.core_type<tc>, window_params = [{transform_indices = @transform_0, window_bounds = array<i64: 256, 128>}, {pipeline_mode = #tpu.pipeline_mode<synchronous>, transform_indices = @transform_1, window_bounds = array<i64: 256, 256>}, {pipeline_mode = #tpu.pipeline_mode<synchronous>, transform_indices = @transform_2, window_bounds = array<i64: 128, 128>}, {transform_indices = @transform_3, window_bounds = array<i64: 128, 128>}]} {
    %c0 = arith.constant 0 : index
    %c0_0 = arith.constant 0 : index
    %0 = vector.load %arg2[%c0, %c0_0] : memref<256x256xbf16, #tpu.memory_space<vmem>>, vector<256x256xbf16>
    %c0_1 = arith.constant 0 : index
    %c0_2 = arith.constant 0 : index
    %1 = vector.load %arg1[%c0_1, %c0_2] : memref<256x128xbf16, #tpu.memory_space<vmem>>, vector<256x128xbf16>
    %cst = arith.constant dense<0.000000e+00> : vector<256x128xf32>
    %2 = tpu.matmul %0, %1, %cst {dimension_numbers = #tpu.dot_dimension_numbers<[1], [0], [0], [1], [0, 0, 1, 1], [], []>} : vector<256x256xbf16>, vector<256x128xbf16>, vector<256x128xf32> -> vector<256x128xf32>
    %3 = arith.mulf %2, %2 : vector<256x128xf32>
    %4 = vector.extract_strided_slice %3 {offsets = [0, 0], sizes = [128, 128], strides = [1, 1]} : vector<256x128xf32> to vector<128x128xf32>
    %5 = vector.extract_strided_slice %3 {offsets = [128, 0], sizes = [128, 128], strides = [1, 1]} : vector<256x128xf32> to vector<128x128xf32>
    %6 = arith.addf %4, %5 : vector<128x128xf32>
    %c0_3 = arith.constant 0 : index
    %c0_4 = arith.constant 0 : index
    %7 = vector.load %arg3[%c0_3, %c0_4] : memref<128x128xf32, #tpu.memory_space<vmem>>, vector<128x128xf32>
    %cst_5 = arith.constant dense<0.000000e+00> : vector<128x128xf32>
    %8 = tpu.matmul %7, %6, %cst_5 {dimension_numbers = #tpu.dot_dimension_numbers<[1], [0], [0], [1], [0, 0, 1, 1], [], []>, precision = #tpu.contract_precision<fp32>} : vector<128x128xf32>, vector<128x128xf32>, vector<128x128xf32> -> vector<128x128xf32>
    %cst_6 = arith.constant 9.99999997E-7 : f32
    %9 = vector.broadcast %cst_6 : f32 to vector<128x128xf32>
    %10 = arith.addf %8, %9 : vector<128x128xf32>
    %11 = math.log %10 : vector<128x128xf32>
    %c0_7 = arith.constant 0 : index
    %c0_8 = arith.constant 0 : index
    %12 = vector.load %arg4[%c0_7, %c0_8] : memref<128x128xf32, #tpu.memory_space<vmem>>, vector<128x128xf32>
    tpu.vector_store %arg4[%c0_7, %c0_8], %11 {strides = array<i32>} : memref<128x128xf32, #tpu.memory_space<vmem>>, vector<128x128xf32>,
    return
  }
  func.func @transform_0(%arg0: i32) -> (i32, i32) {
    %c0_i32 = arith.constant 0 : i32
    %c0_i32_0 = arith.constant 0 : i32
    return %c0_i32, %arg0 : i32, i32
  }
  func.func @transform_1(%arg0: i32) -> (i32, i32) {
    %c0_i32 = arith.constant 0 : i32
    %c0_i32_0 = arith.constant 0 : i32
    %c0_i32_1 = arith.constant 0 : i32
    return %c0_i32, %c0_i32_0 : i32, i32
  }
  func.func @transform_2(%arg0: i32) -> (i32, i32) {
    %c0_i32 = arith.constant 0 : i32
    %c0_i32_0 = arith.constant 0 : i32
    %c0_i32_1 = arith.constant 0 : i32
    return %c0_i32, %c0_i32_0 : i32, i32
  }
  func.func @transform_3(%arg0: i32) -> (i32, i32) {
    %c0_i32 = arith.constant 0 : i32
    %c0_i32_0 = arith.constant 0 : i32
    return %c0_i32, %arg0 : i32, i32
  }
}

</mosaic_0001>

<llo_original>
// kernel: tpu_custom_call.1
$region0: #{tpu_custom_call.1}
  #allocation0 [shape = 'u32[]', space=smem, size = 0x4, offset = 0x4, fixed_abs, tag = 'smem constant byte address 0x4 - core index']
  #allocation1 [shape = 'u32[72,128]{1,0:T(1,128)}', space=vmem, size = 0x9000, scoped, tag = 'internal scratch']
  %s0 = inlined_call_operand.hbm [shape: bf16[256,128], index: 0, kind: input, shape index: {}]
  %s1 = inlined_call_operand.hbm [shape: bf16[256,256], index: 1, kind: input, shape index: {}]
  %s2 = inlined_call_operand.hbm [shape: f32[128,128], index: 2, kind: input, shape index: {}]
  %s3 = inlined_call_operand.hbm [shape: f32[128,128], index: 3, kind: output, shape index: {}]
  %s4 = sld [smem:[#allocation0]]
  $region34: #{tpu_custom_call.1} parent=0
    _
  %s6 = ssub.s32 1, %s4
  %s7 = scalar_select 0, %s6, %s4
  $region1: #{tpu_custom_call.1} parent=0
    #allocation2 [shape = 'u8[65536]{0}', space=vmem, size = 0x10000, scoped, tag = 'input window, operand 0, single buffered']
    #allocation3 [shape = 's32[1]{0}', space=sflag, size = 0x4, scoped, tag = 'scoped memory for tpu_custom_call.1']
    #allocation4 [shape = 's32[1]{0}', space=sflag, size = 0x4, scoped, tag = 'scoped memory for tpu_custom_call.1']
    #allocation5 [shape = 'u8[131072]{0}', space=vmem, size = 0x20000, scoped, tag = 'input window, operand 1, single buffered']
    #allocation6 [shape = 's32[1]{0}', space=sflag, size = 0x4, scoped, tag = 'scoped memory for tpu_custom_call.1']
    #allocation7 [shape = 'u8[65536]{0}', space=vmem, size = 0x10000, scoped, tag = 'input window, operand 2, single buffered']
    #allocation8 [shape = 'u8[65536]{0}', space=vmem, size = 0x10000, scoped, tag = 'output window, operand 0, single buffered']
    %8 = vsyncpa [#allocation3], 0
    %9 = vsyncpa [#allocation6], 0
    %10 = vsyncpa [#allocation4], 0
    // Predicated region
    $region2: #{tpu_custom_call.1} parent=1 // pred_check
      _
    $region3: #{tpu_custom_call.1} parent=1 // pred_check_branch
      %12 = sbr.rel (0) target = $region5
    $region4: #{tpu_custom_call.1} parent=1 // pred_region
      %14 = vsyncadd [#allocation3], 0
      %s15 = sshll.u32 %s0, 4
      %s16 = int_to_ptr.hbm [resolvable:$true] %s15
      %s17 = sshll.u32 [#allocation2], 4
      %s18 = int_to_ptr.vmem [resolvable:$true] %s17
      %23 = dma.hbm_to_vmem [thread:$0]  %s16, 2048, %s18, [#allocation3], 64, 64, 4
    $region5: #{tpu_custom_call.1} parent=1 // pred_fallthru
      _
    // Predicated region
    $region6: #{tpu_custom_call.1} parent=1 // pred_check
      _
    $region7: #{tpu_custom_call.1} parent=1 // pred_check_branch
      %25 = sbr.rel (0) target = $region9
    $region8: #{tpu_custom_call.1} parent=1 // pred_region
      %27 = vsyncadd [#allocation6], 0
      %s28 = sshll.u32 %s1, 4
      %s29 = int_to_ptr.hbm [resolvable:$true] %s28
      %s30 = sshll.u32 [#allocation5], 4
      %s31 = int_to_ptr.vmem [resolvable:$true] %s30
      %36 = dma.hbm_to_vmem [thread:$0]  %s29, 4096, %s31, [#allocation6], 128, 128, 8
    $region9: #{tpu_custom_call.1} parent=1 // pred_fallthru
      _
    // Predicated region
    $region10: #{tpu_custom_call.1} parent=1 // pred_check
      _
    $region11: #{tpu_custom_call.1} parent=1 // pred_check_branch
      %38 = sbr.rel (0) target = $region13
    $region12: #{tpu_custom_call.1} parent=1 // pred_region
      %40 = vsyncadd [#allocation6], 0
      %s41 = sshll.u32 %s2, 4
      %s42 = int_to_ptr.hbm [resolvable:$true] %s41
      %s43 = sshll.u32 [#allocation7], 4
      %s44 = int_to_ptr.vmem [resolvable:$true] %s43
      %49 = dma.hbm_to_vmem [thread:$0]  %s42, 2048, %s44, [#allocation6], 128, 128, 8
    $region13: #{tpu_custom_call.1} parent=1 // pred_fallthru
      _
    // Predicated region
    $region14: #{tpu_custom_call.1} parent=1 // pred_check
      _
    $region15: #{tpu_custom_call.1} parent=1 // pred_check_branch
      %51 = sbr.rel (0) target = $region17
    $region16: #{tpu_custom_call.1} parent=1 // pred_region
      %53 = dma.done [#allocation3], 2048
    $region17: #{tpu_custom_call.1} parent=1 // pred_fallthru
      _
    // Predicated region
    $region18: #{tpu_custom_call.1} parent=1 // pred_check
      _
    $region19: #{tpu_custom_call.1} parent=1 // pred_check_branch
      %55 = sbr.rel (0) target = $region21
    $region20: #{tpu_custom_call.1} parent=1 // pred_region
      %57 = dma.done [#allocation6], 4096
    $region21: #{tpu_custom_call.1} parent=1 // pred_fallthru
      _
    // Predicated region
    $region22: #{tpu_custom_call.1} parent=1 // pred_check
      _
    $region23: #{tpu_custom_call.1} parent=1 // pred_check_branch
      %59 = sbr.rel (0) target = $region25
    $region24: #{tpu_custom_call.1} parent=1 // pred_region
      %61 = dma.done [#allocation6], 2048
    $region25: #{tpu_custom_call.1} parent=1 // pred_fallthru
      _
    %v62 = vld [vmem:[#allocation5] sm:$0xff]
    %v63 = vld [vmem:[#allocation5 + $0x8] sm:$0xff]
    %v64 = vld [vmem:[#allocation5 + $0x10] sm:$0xff]
    %v65 = vld [vmem:[#allocation5 + $0x18] sm:$0xff]
    %v66 = vld [vmem:[#allocation5 + $0x20] sm:$0xff]
    %v67 = vld [vmem:[#allocation5 + $0x28] sm:$0xff]
    %v68 = vld [vmem:[#allocation5 + $0x30] sm:$0xff]
    %v69 = vld [vmem:[#allocation5 + $0x38] sm:$0xff]
    %v70 = vld [vmem:[#allocation5 + $0x40] sm:$0xff]
    %v71 = vld [vmem:[#allocation5 + $0x48] sm:$0xff]
    %v72 = vld [vmem:[#allocation5 + $0x50] sm:$0xff]
    %v73 = vld [vmem:[#allocation5 + $0x58] sm:$0xff]
    %v74 = vld [vmem:[#allocation5 + $0x60] sm:$0xff]
    %v75 = vld [vmem:[#allocation5 + $0x68] sm:$0xff]
    %v76 = vld [vmem:[#allocation5 + $0x70] sm:$0xff]
    %v77 = vld [vmem:[#allocation5 + $0x78] sm:$0xff]
    %v78 = vld [vmem:[#allocation5 + $0x80] sm:$0xff]
    %v79 = vld [vmem:[#allocation5 + $0x88] sm:$0xff]
    %v80 = vld [vmem:[#allocation5 + $0x90] sm:$0xff]
    %v81 = vld [vmem:[#allocation5 + $0x98] sm:$0xff]
    %v82 = vld [vmem:[#allocation5 + $0xa0] sm:$0xff]
    %v83 = vld [vmem:[#allocation5 + $0xa8] sm:$0xff]
    %v84 = vld [vmem:[#allocation5 + $0xb0] sm:$0xff]
    %v85 = vld [vmem:[#allocation5 + $0xb8] sm:$0xff]
    %v86 = vld [vmem:[#allocation5 + $0xc0] sm:$0xff]
    %v87 = vld [vmem:[#allocation5 + $0xc8] sm:$0xff]
    %v88 = vld [vmem:[#allocation5 + $0xd0] sm:$0xff]
    %v89 = vld [vmem:[#allocation5 + $0xd8] sm:$0xff]
    %v90 = vld [vmem:[#allocation5 + $0xe0] sm:$0xff]
    %v91 = vld [vmem:[#allocation5 + $0xe8] sm:$0xff]
    %v92 = vld [vmem:[#allocation5 + $0xf0] sm:$0xff]
    %v93 = vld [vmem:[#allocation5 + $0xf8] sm:$0xff]
    %v94 = vld [vmem:[#allocation2] sm:$0xf]
    %v95 = vld [vmem:[#allocation2 + $0x4] sm:$0xf]
    %v96 = vld [vmem:[#allocation2 + $0x8] sm:$0xf]
    %v97 = vld [vmem:[#allocation2 + $0xc] sm:$0xf]
    %v98 = vld [vmem:[#allocation2 + $0x10] sm:$0xf]
    %v99 = vld [vmem:[#allocation2 + $0x14] sm:$0xf]
    %v100 = vld [vmem:[#allocation2 + $0x18] sm:$0xf]
    %v101 = vld [vmem:[#allocation2 + $0x1c] sm:$0xf]
    %v102 = vld [vmem:[#allocation2 + $0x20] sm:$0xf]
    %v103 = vld [vmem:[#allocation2 + $0x24] sm:$0xf]
    %v104 = vld [vmem:[#allocation2 + $0x28] sm:$0xf]
    %v105 = vld [vmem:[#allocation2 + $0x2c] sm:$0xf]
    %v106 = vld [vmem:[#allocation2 + $0x30] sm:$0xf]
    %v107 = vld [vmem:[#allocation2 + $0x34] sm:$0xf]
    %v108 = vld [vmem:[#allocation2 + $0x38] sm:$0xf]
    %v109 = vld [vmem:[#allocation2 + $0x3c] sm:$0xf]
    %v110 = vld [vmem:[#allocation2 + $0x40] sm:$0xf]
    %v111 = vld [vmem:[#allocation2 + $0x44] sm:$0xf]
    %v112 = vld [vmem:[#allocation2 + $0x48] sm:$0xf]
    %v113 = vld [vmem:[#allocation2 + $0x4c] sm:$0xf]
    %v114 = vld [vmem:[#allocation2 + $0x50] sm:$0xf]
    %v115 = vld [vmem:[#allocation2 + $0x54] sm:$0xf]
    %v116 = vld [vmem:[#allocation2 + $0x58] sm:$0xf]
    %v117 = vld [vmem:[#allocation2 + $0x5c] sm:$0xf]
    %v118 = vld [vmem:[#allocation2 + $0x60] sm:$0xf]
    %v119 = vld [vmem:[#allocation2 + $0x64] sm:$0xf]
    %v120 = vld [vmem:[#allocation2 + $0x68] sm:$0xf]
    %v121 = vld [vmem:[#allocation2 + $0x6c] sm:$0xf]
    %v122 = vld [vmem:[#allocation2 + $0x70] sm:$0xf]
    %v123 = vld [vmem:[#allocation2 + $0x74] sm:$0xf]
    %v124 = vld [vmem:[#allocation2 + $0x78] sm:$0xf]
    %v125 = vld [vmem:[#allocation2 + $0x7c] sm:$0xf]
    %v158 = vunpack.c.l.b16 %v62
    %v159 = vunpack.c.h.b16 %v62
    %v160 = vunpack.c.l.b16 %v63
    %v161 = vunpack.c.h.b16 %v63
    %v162 = vunpack.c.l.b16 %v64
    %v163 = vunpack.c.h.b16 %v64
    %v164 = vunpack.c.l.b16 %v65
    %v165 = vunpack.c.h.b16 %v65
    %v166 = vunpack.c.l.b16 %v66
    %v167 = vunpack.c.h.b16 %v66
    %v168 = vunpack.c.l.b16 %v67
    %v169 = vunpack.c.h.b16 %v67
    %v170 = vunpack.c.l.b16 %v68
    %v171 = vunpack.c.h.b16 %v68
    %v172 = vunpack.c.l.b16 %v69
    %v173 = vunpack.c.h.b16 %v69
    %v174 = vunpack.c.l.b16 %v70
    %v175 = vunpack.c.h.b16 %v70
    %v176 = vunpack.c.l.b16 %v71
    %v177 = vunpack.c.h.b16 %v71
    %v178 = vunpack.c.l.b16 %v72
    %v179 = vunpack.c.h.b16 %v72
    %v180 = vunpack.c.l.b16 %v73
    %v181 = vunpack.c.h.b16 %v73
    %v182 = vunpack.c.l.b16 %v74
    %v183 = vunpack.c.h.b16 %v74
    %v184 = vunpack.c.l.b16 %v75
    %v185 = vunpack.c.h.b16 %v75
    %v186 = vunpack.c.l.b16 %v76
    %v187 = vunpack.c.h.b16 %v76
    %v188 = vunpack.c.l.b16 %v77
    %v189 = vunpack.c.h.b16 %v77
    %v190 = vunpack.c.l.b16 %v78
    %v191 = vunpack.c.h.b16 %v78
    %v192 = vunpack.c.l.b16 %v79
    %v193 = vunpack.c.h.b16 %v79
    %v194 = vunpack.c.l.b16 %v80
    %v195 = vunpack.c.h.b16 %v80
    %v196 = vunpack.c.l.b16 %v81
    %v197 = vunpack.c.h.b16 %v81
    %v198 = vunpack.c.l.b16 %v82
    %v199 = vunpack.c.h.b16 %v82
    %v200 = vunpack.c.l.b16 %v83
    %v201 = vunpack.c.h.b16 %v83
    %v202 = vunpack.c.l.b16 %v84
    %v203 = vunpack.c.h.b16 %v84
    %v204 = vunpack.c.l.b16 %v85
    %v205 = vunpack.c.h.b16 %v85
    %v206 = vunpack.c.l.b16 %v86
    %v207 = vunpack.c.h.b16 %v86
    %v208 = vunpack.c.l.b16 %v87
    %v209 = vunpack.c.h.b16 %v87
    %v210 = vunpack.c.l.b16 %v88
    %v211 = vunpack.c.h.b16 %v88
    %v212 = vunpack.c.l.b16 %v89
    %v213 = vunpack.c.h.b16 %v89
    %v214 = vunpack.c.l.b16 %v90
    %v215 = vunpack.c.h.b16 %v90
    %v216 = vunpack.c.l.b16 %v91
    %v217 = vunpack.c.h.b16 %v91
    %v218 = vunpack.c.l.b16 %v92
    %v219 = vunpack.c.h.b16 %v92
    %v220 = vunpack.c.l.b16 %v93
    %v221 = vunpack.c.h.b16 %v93
    %v222 = vpack.c.b16 %v160, %v158
    %v223 = vpack.c.b16 %v161, %v159
    %v224 = vpack.c.b16 %v164, %v162
    %v225 = vpack.c.b16 %v165, %v163
    %v226 = vpack.c.b16 %v168, %v166
    %v227 = vpack.c.b16 %v169, %v167
    %v228 = vpack.c.b16 %v172, %v170
    %v229 = vpack.c.b16 %v173, %v171
    %v230 = vpack.c.b16 %v176, %v174
    %v231 = vpack.c.b16 %v177, %v175
    %v232 = vpack.c.b16 %v180, %v178
    %v233 = vpack.c.b16 %v181, %v179
    %v234 = vpack.c.b16 %v184, %v182
    %v235 = vpack.c.b16 %v185, %v183
    %v236 = vpack.c.b16 %v188, %v186
    %v237 = vpack.c.b16 %v189, %v187
    %v238 = vpack.c.b16 %v192, %v190
    %v239 = vpack.c.b16 %v193, %v191
    %v240 = vpack.c.b16 %v196, %v194
    %v241 = vpack.c.b16 %v197, %v195
    %v242 = vpack.c.b16 %v200, %v198
    %v243 = vpack.c.b16 %v201, %v199
    %v244 = vpack.c.b16 %v204, %v202
    %v245 = vpack.c.b16 %v205, %v203
    %v246 = vpack.c.b16 %v208, %v206
    %v247 = vpack.c.b16 %v209, %v207
    %v248 = vpack.c.b16 %v212, %v210
    %v249 = vpack.c.b16 %v213, %v211
    %v250 = vpack.c.b16 %v216, %v214
    %v251 = vpack.c.b16 %v217, %v215
    %v252 = vpack.c.b16 %v220, %v218
    %v253 = vpack.c.b16 %v221, %v219
    %v318 = vunpack.c.l.b16 %v94
    %v319 = vunpack.c.l.b16 %v95
    %v320 = vunpack.c.l.b16 %v96
    %v321 = vunpack.c.l.b16 %v97
    %v322 = vunpack.c.l.b16 %v98
    %v323 = vunpack.c.l.b16 %v99
    %v324 = vunpack.c.l.b16 %v100
    %v325 = vunpack.c.l.b16 %v101
    %v326 = vunpack.c.l.b16 %v102
    %v327 = vunpack.c.l.b16 %v103
    %v328 = vunpack.c.l.b16 %v104
    %v329 = vunpack.c.l.b16 %v105
    %v330 = vunpack.c.l.b16 %v106
    %v331 = vunpack.c.l.b16 %v107
    %v332 = vunpack.c.l.b16 %v108
    %v333 = vunpack.c.l.b16 %v109
    %v334 = vunpack.c.l.b16 %v110
    %v335 = vunpack.c.l.b16 %v111
    %v336 = vunpack.c.l.b16 %v112
    %v337 = vunpack.c.l.b16 %v113
    %v338 = vunpack.c.l.b16 %v114
    %v339 = vunpack.c.l.b16 %v115
    %v340 = vunpack.c.l.b16 %v116
    %v341 = vunpack.c.l.b16 %v117
    %v342 = vunpack.c.l.b16 %v118
    %v343 = vunpack.c.l.b16 %v119
    %v344 = vunpack.c.l.b16 %v120
    %v345 = vunpack.c.l.b16 %v121
    %v346 = vunpack.c.l.b16 %v122
    %v347 = vunpack.c.l.b16 %v123
    %v348 = vunpack.c.l.b16 %v124
    %v349 = vunpack.c.l.b16 %v125
    %v350 = vpack.c.b16 %v319, %v318
    %v351 = vpack.c.b16 %v321, %v320
    %v352 = vpack.c.b16 %v323, %v322
    %v353 = vpack.c.b16 %v325, %v324
    %v354 = vpack.c.b16 %v327, %v326
    %v355 = vpack.c.b16 %v329, %v328
    %v356 = vpack.c.b16 %v331, %v330
    %v357 = vpack.c.b16 %v333, %v332
    %v358 = vpack.c.b16 %v335, %v334
    %v359 = vpack.c.b16 %v337, %v336
    %v360 = vpack.c.b16 %v339, %v338
    %v361 = vpack.c.b16 %v341, %v340
    %v362 = vpack.c.b16 %v343, %v342
    %v363 = vpack.c.b16 %v345, %v344
    %v364 = vpack.c.b16 %v347, %v346
    %v365 = vpack.c.b16 %v349, %v348
    %382 = vmatpush.bf16.msra.mxu0 %v357
    %383 = vmatpush.bf16.msra.mxu0 %v356
    %384 = vmatpush.bf16.msra.mxu0 %v355
    %385 = vmatpush.bf16.msra.mxu0 %v354
    %386 = vmatpush.bf16.msra.mxu0 %v353
    %387 = vmatpush.bf16.msra.mxu0 %v352
    %388 = vmatpush.bf16.msra.mxu0 %v351
    %389 = vmatpush.bf16.msra.mxu0 %v350
    %390 = vmatmul.bf16.gmra.mxu0 %v222
    %v391 = vpop.f32.mrf.mxu0
    %v392 = vadd.f32 0.0, %v391
    %v393 = vpop.f32.mrf.mxu0
    %v394 = vadd.f32 0.0, %v393
    %395 = vmatmul.bf16.gmra.mxu0 %v224
    %v396 = vpop.f32.mrf.mxu0
    %v397 = vadd.f32 0.0, %v396
    %v398 = vpop.f32.mrf.mxu0
    %v399 = vadd.f32 0.0, %v398
    %400 = vmatmul.bf16.gmra.mxu0 %v226
    %v401 = vpop.f32.mrf.mxu0
    %v402 = vadd.f32 0.0, %v401
    %v403 = vpop.f32.mrf.mxu0
    %v404 = vadd.f32 0.0, %v403
    %405 = vmatmul.bf16.gmra.mxu0 %v228
    %v406 = vpop.f32.mrf.mxu0
    %v407 = vadd.f32 0.0, %v406
    %v408 = vpop.f32.mrf.mxu0
    %v409 = vadd.f32 0.0, %v408
    %410 = vmatmul.bf16.gmra.mxu0 %v230
    %v411 = vpop.f32.mrf.mxu0
    %v412 = vadd.f32 0.0, %v411
    %v413 = vpop.f32.mrf.mxu0
    %v414 = vadd.f32 0.0, %v413
    %415 = vmatmul.bf16.gmra.mxu0 %v232
    %v416 = vpop.f32.mrf.mxu0
    %v417 = vadd.f32 0.0, %v416
    %v418 = vpop.f32.mrf.mxu0
    %v419 = vadd.f32 0.0, %v418
    %420 = vmatmul.bf16.gmra.mxu0 %v234
    %v421 = vpop.f32.mrf.mxu0
    %v422 = vadd.f32 0.0, %v421
    %v423 = vpop.f32.mrf.mxu0
    %v424 = vadd.f32 0.0, %v423
    %425 = vmatmul.bf16.gmra.mxu0 %v236
    %v426 = vpop.f32.mrf.mxu0
    %v427 = vadd.f32 0.0, %v426
    %v428 = vpop.f32.mrf.mxu0
    %v429 = vadd.f32 0.0, %v428
    %430 = vmatmul.bf16.gmra.mxu0 %v238
    %v431 = vpop.f32.mrf.mxu0
    %v432 = vadd.f32 0.0, %v431
    %v433 = vpop.f32.mrf.mxu0
    %v434 = vadd.f32 0.0, %v433
    %435 = vmatmul.bf16.gmra.mxu0 %v240
    %v436 = vpop.f32.mrf.mxu0
    %v437 = vadd.f32 0.0, %v436
    %v438 = vpop.f32.mrf.mxu0
    %v439 = vadd.f32 0.0, %v438
    %440 = vmatmul.bf16.gmra.mxu0 %v242
    %v441 = vpop.f32.mrf.mxu0
    %v442 = vadd.f32 0.0, %v441
    %v443 = vpop.f32.mrf.mxu0
    %v444 = vadd.f32 0.0, %v443
    %445 = vmatmul.bf16.gmra.mxu0 %v244
    %v446 = vpop.f32.mrf.mxu0
    %v447 = vadd.f32 0.0, %v446
    %v448 = vpop.f32.mrf.mxu0
    %v449 = vadd.f32 0.0, %v448
    %450 = vmatmul.bf16.gmra.mxu0 %v246
    %v451 = vpop.f32.mrf.mxu0
    %v452 = vadd.f32 0.0, %v451
    %v453 = vpop.f32.mrf.mxu0
    %v454 = vadd.f32 0.0, %v453
    %455 = vmatmul.bf16.gmra.mxu0 %v248
    %v456 = vpop.f32.mrf.mxu0
    %v457 = vadd.f32 0.0, %v456
    %v458 = vpop.f32.mrf.mxu0
    %v459 = vadd.f32 0.0, %v458
    %460 = vmatmul.bf16.gmra.mxu0 %v250
    %v461 = vpop.f32.mrf.mxu0
    %v462 = vadd.f32 0.0, %v461
    %v463 = vpop.f32.mrf.mxu0
    %v464 = vadd.f32 0.0, %v463
    %465 = vmatmul.bf16.gmra.mxu0 %v252
    %v466 = vpop.f32.mrf.mxu0
    %v467 = vadd.f32 0.0, %v466
    %v468 = vpop.f32.mrf.mxu0
    %v469 = vadd.f32 0.0, %v468
    %470 = vdwg.mxu0
    %471 = vmatpush.bf16.msra.mxu0 %v365
    %472 = vmatpush.bf16.msra.mxu0 %v364
    %473 = vmatpush.bf16.msra.mxu0 %v363
    %474 = vmatpush.bf16.msra.mxu0 %v362
    %475 = vmatpush.bf16.msra.mxu0 %v361
    %476 = vmatpush.bf16.msra.mxu0 %v360
    %477 = vmatpush.bf16.msra.mxu0 %v359
    %478 = vmatpush.bf16.msra.mxu0 %v358
    %479 = vmatmul.bf16.gmra.mxu0 %v223
    %v480 = vpop.f32.mrf.mxu0
    %v481 = vadd.f32 %v392, %v480
    %v482 = vpop.f32.mrf.mxu0
    %v483 = vadd.f32 %v394, %v482
    %484 = vmatmul.bf16.gmra.mxu0 %v225
    %v485 = vpop.f32.mrf.mxu0
    %v486 = vadd.f32 %v397, %v485
    %v487 = vpop.f32.mrf.mxu0
    %v488 = vadd.f32 %v399, %v487
    %489 = vmatmul.bf16.gmra.mxu0 %v227
    %v490 = vpop.f32.mrf.mxu0
    %v491 = vadd.f32 %v402, %v490
    %v492 = vpop.f32.mrf.mxu0
    %v493 = vadd.f32 %v404, %v492
    %494 = vmatmul.bf16.gmra.mxu0 %v229
    %v495 = vpop.f32.mrf.mxu0
    %v496 = vadd.f32 %v407, %v495
    %v497 = vpop.f32.mrf.mxu0
    %v498 = vadd.f32 %v409, %v497
    %499 = vmatmul.bf16.gmra.mxu0 %v231
    %v500 = vpop.f32.mrf.mxu0
    %v501 = vadd.f32 %v412, %v500
    %v502 = vpop.f32.mrf.mxu0
    %v503 = vadd.f32 %v414, %v502
    %504 = vmatmul.bf16.gmra.mxu0 %v233
    %v505 = vpop.f32.mrf.mxu0
    %v506 = vadd.f32 %v417, %v505
    %v507 = vpop.f32.mrf.mxu0
    %v508 = vadd.f32 %v419, %v507
    %509 = vmatmul.bf16.gmra.mxu0 %v235
    %v510 = vpop.f32.mrf.mxu0
    %v511 = vadd.f32 %v422, %v510
    %v512 = vpop.f32.mrf.mxu0
    %v513 = vadd.f32 %v424, %v512
    %514 = vmatmul.bf16.gmra.mxu0 %v237
    %v515 = vpop.f32.mrf.mxu0
    %v516 = vadd.f32 %v427, %v515
    %v517 = vpop.f32.mrf.mxu0
    %v518 = vadd.f32 %v429, %v517
    %519 = vmatmul.bf16.gmra.mxu0 %v239
    %v520 = vpop.f32.mrf.mxu0
    %v521 = vadd.f32 %v432, %v520
    %v522 = vpop.f32.mrf.mxu0
    %v523 = vadd.f32 %v434, %v522
    %524 = vmatmul.bf16.gmra.mxu0 %v241
    %v525 = vpop.f32.mrf.mxu0
    %v526 = vadd.f32 %v437, %v525
    %v527 = vpop.f32.mrf.mxu0
    %v528 = vadd.f32 %v439, %v527
    %529 = vmatmul.bf16.gmra.mxu0 %v243
    %v530 = vpop.f32.mrf.mxu0
    %v531 = vadd.f32 %v442, %v530
    %v532 = vpop.f32.mrf.mxu0
    %v533 = vadd.f32 %v444, %v532
    %534 = vmatmul.bf16.gmra.mxu0 %v245
    %v535 = vpop.f32.mrf.mxu0
    %v536 = vadd.f32 %v447, %v535
    %v537 = vpop.f32.mrf.mxu0
    %v538 = vadd.f32 %v449, %v537
    %539 = vmatmul.bf16.gmra.mxu0 %v247
    %v540 = vpop.f32.mrf.mxu0
    %v541 = vadd.f32 %v452, %v540
    %v542 = vpop.f32.mrf.mxu0
    %v543 = vadd.f32 %v454, %v542
    %544 = vmatmul.bf16.gmra.mxu0 %v249
    %v545 = vpop.f32.mrf.mxu0
    %v546 = vadd.f32 %v457, %v545
    %v547 = vpop.f32.mrf.mxu0
    %v548 = vadd.f32 %v459, %v547
    %549 = vmatmul.bf16.gmra.mxu0 %v251
    %v550 = vpop.f32.mrf.mxu0
    %v551 = vadd.f32 %v462, %v550
    %v552 = vpop.f32.mrf.mxu0
    %v553 = vadd.f32 %v464, %v552
    %554 = vmatmul.bf16.gmra.mxu0 %v253
    %v555 = vpop.f32.mrf.mxu0
    %v556 = vadd.f32 %v467, %v555
    %v557 = vpop.f32.mrf.mxu0
    %v558 = vadd.f32 %v469, %v557
    %559 = vdwg.mxu0
    %v560 = vmul.f32 %v481, %v481
    %v561 = vmul.f32 %v483, %v483
    %v562 = vmul.f32 %v486, %v486
    %v563 = vmul.f32 %v488, %v488
    %v564 = vmul.f32 %v491, %v491
    %v565 = vmul.f32 %v493, %v493
    %v566 = vmul.f32 %v496, %v496
    %v567 = vmul.f32 %v498, %v498
    %v568 = vmul.f32 %v501, %v501
    %v569 = vmul.f32 %v503, %v503
    %v570 = vmul.f32 %v506, %v506
    %v571 = vmul.f32 %v508, %v508
    %v572 = vmul.f32 %v511, %v511
    %v573 = vmul.f32 %v513, %v513
    %v574 = vmul.f32 %v516, %v516
    %v575 = vmul.f32 %v518, %v518
    %v576 = vmul.f32 %v521, %v521
    %v577 = vmul.f32 %v523, %v523
    %v578 = vmul.f32 %v526, %v526
    %v579 = vmul.f32 %v528, %v528
    %v580 = vmul.f32 %v531, %v531
    %v581 = vmul.f32 %v533, %v533
    %v582 = vmul.f32 %v536, %v536
    %v583 = vmul.f32 %v538, %v538
    %v584 = vmul.f32 %v541, %v541
    %v585 = vmul.f32 %v543, %v543
    %v586 = vmul.f32 %v546, %v546
    %v587 = vmul.f32 %v548, %v548
    %v588 = vmul.f32 %v551, %v551
    %v589 = vmul.f32 %v553, %v553
    %v590 = vmul.f32 %v556, %v556
    %v591 = vmul.f32 %v558, %v558
    %v592 = vadd.f32 %v560, %v576
    %v593 = vadd.f32 %v561, %v577
    %v594 = vadd.f32 %v562, %v578
    %v595 = vadd.f32 %v563, %v579
    %v596 = vadd.f32 %v564, %v580
    %v597 = vadd.f32 %v565, %v581
    %v598 = vadd.f32 %v566, %v582
    %v599 = vadd.f32 %v567, %v583
    %v600 = vadd.f32 %v568, %v584
    %v601 = vadd.f32 %v569, %v585
    %v602 = vadd.f32 %v570, %v586
    %v603 = vadd.f32 %v571, %v587
    %v604 = vadd.f32 %v572, %v588
    %v605 = vadd.f32 %v573, %v589
    %v606 = vadd.f32 %v574, %v590
    %v607 = vadd.f32 %v575, %v591
    %v608 = vld [vmem:[#allocation7] sm:$0xff]
    %v609 = vld [vmem:[#allocation7 + $0x8] sm:$0xff]
    %v610 = vld [vmem:[#allocation7 + $0x10] sm:$0xff]
    %v611 = vld [vmem:[#allocation7 + $0x18] sm:$0xff]
    %v612 = vld [vmem:[#allocation7 + $0x20] sm:$0xff]
    %v613 = vld [vmem:[#allocation7 + $0x28] sm:$0xff]
    %v614 = vld [vmem:[#allocation7 + $0x30] sm:$0xff]
    %v615 = vld [vmem:[#allocation7 + $0x38] sm:$0xff]
    %v616 = vld [vmem:[#allocation7 + $0x40] sm:$0xff]
    %v617 = vld [vmem:[#allocation7 + $0x48] sm:$0xff]
    %v618 = vld [vmem:[#allocation7 + $0x50] sm:$0xff]
    %v619 = vld [vmem:[#allocation7 + $0x58] sm:$0xff]
    %v620 = vld [vmem:[#allocation7 + $0x60] sm:$0xff]
    %v621 = vld [vmem:[#allocation7 + $0x68] sm:$0xff]
    %v622 = vld [vmem:[#allocation7 + $0x70] sm:$0xff]
    %v623 = vld [vmem:[#allocation7 + $0x78] sm:$0xff]
    %v624 = vand.u32 %v607, 4294901760
    %625 = vmatpush.msra.mxu0 %v624
    %v626 = vand.u32 %v606, 4294901760
    %627 = vmatpush.msra.mxu0 %v626
    %v628 = vand.u32 %v605, 4294901760
    %629 = vmatpush.msra.mxu0 %v628
    %v630 = vand.u32 %v604, 4294901760
    %631 = vmatpush.msra.mxu0 %v630
    %v632 = vand.u32 %v603, 4294901760
    %633 = vmatpush.msra.mxu0 %v632
    %v634 = vand.u32 %v602, 4294901760
    %635 = vmatpush.msra.mxu0 %v634
    %v636 = vand.u32 %v601, 4294901760
    %637 = vmatpush.msra.mxu0 %v636
    %v638 = vand.u32 %v600, 4294901760
    %639 = vmatpush.msra.mxu0 %v638
    %v640 = vand.u32 %v599, 4294901760
    %641 = vmatpush.msra.mxu0 %v640
    %v642 = vand.u32 %v598, 4294901760
    %643 = vmatpush.msra.mxu0 %v642
    %v644 = vand.u32 %v597, 4294901760
    %645 = vmatpush.msra.mxu0 %v644
    %v646 = vand.u32 %v596, 4294901760
    %647 = vmatpush.msra.mxu0 %v646
    %v648 = vand.u32 %v595, 4294901760
    %649 = vmatpush.msra.mxu0 %v648
    %v650 = vand.u32 %v594, 4294901760
    %651 = vmatpush.msra.mxu0 %v650
    %v652 = vand.u32 %v593, 4294901760
    %653 = vmatpush.msra.mxu0 %v652
    %v654 = vand.u32 %v592, 4294901760
    %655 = vmatpush.msra.mxu0 %v654
    %v656 = vand.u32 %v608, 4294901760
    %v657 = vsub.f32 %v608, %v656
    %v658 = vand.u32 %v657, 4294901760
    %v659 = vsub.f32 %v657, %v658
    %v660 = vand.u32 %v659, 4294901760
    %661 = vmatmul.f32.gmra.mxu0 %v660
    %v662 = vpop.f32.mrf.mxu0
    %v663 = vadd.f32 1e-06, %v662
    %v664 = vand.u32 %v609, 4294901760
    %v665 = vsub.f32 %v609, %v664
    %v666 = vand.u32 %v665, 4294901760
    %v667 = vsub.f32 %v665, %v666
    %v668 = vand.u32 %v667, 4294901760
    %669 = vmatmul.f32.gmra.mxu0 %v668
    %v670 = vpop.f32.mrf.mxu0
    %v671 = vadd.f32 1e-06, %v670
    %v672 = vand.u32 %v610, 4294901760
    %v673 = vsub.f32 %v610, %v672
    %v674 = vand.u32 %v673, 4294901760
    %v675 = vsub.f32 %v673, %v674
    %v676 = vand.u32 %v675, 4294901760
    %677 = vmatmul.f32.gmra.mxu0 %v676
    %v678 = vpop.f32.mrf.mxu0
    %v679 = vadd.f32 1e-06, %v678
    %v680 = vand.u32 %v611, 4294901760
    %v681 = vsub.f32 %v611, %v680
    %v682 = vand.u32 %v681, 4294901760
    %v683 = vsub.f32 %v681, %v682
    %v684 = vand.u32 %v683, 4294901760
    %685 = vmatmul.f32.gmra.mxu0 %v684
    %v686 = vpop.f32.mrf.mxu0
    %v687 = vadd.f32 1e-06, %v686
    %v688 = vand.u32 %v612, 4294901760
    %v689 = vsub.f32 %v612, %v688
    %v690 = vand.u32 %v689, 4294901760
    %v691 = vsub.f32 %v689, %v690
    %v692 = vand.u32 %v691, 4294901760
    %693 = vmatmul.f32.gmra.mxu0 %v692
    %v694 = vpop.f32.mrf.mxu0
    %v695 = vadd.f32 1e-06, %v694
    %v696 = vand.u32 %v613, 4294901760
    %v697 = vsub.f32 %v613, %v696
    %v698 = vand.u32 %v697, 4294901760
    %v699 = vsub.f32 %v697, %v698
    %v700 = vand.u32 %v699, 4294901760
    %701 = vmatmul.f32.gmra.mxu0 %v700
    %v702 = vpop.f32.mrf.mxu0
    %v703 = vadd.f32 1e-06, %v702
    %v704 = vand.u32 %v614, 4294901760
    %v705 = vsub.f32 %v614, %v704
    %v706 = vand.u32 %v705, 4294901760
    %v707 = vsub.f32 %v705, %v706
    %v708 = vand.u32 %v707, 4294901760
    %709 = vmatmul.f32.gmra.mxu0 %v708
    %v710 = vpop.f32.mrf.mxu0
    %v711 = vadd.f32 1e-06, %v710
    %v712 = vand.u32 %v615, 4294901760
    %v713 = vsub.f32 %v615, %v712
    %v714 = vand.u32 %v713, 4294901760
    %v715 = vsub.f32 %v713, %v714
    %v716 = vand.u32 %v715, 4294901760
    %717 = vmatmul.f32.gmra.mxu0 %v716
    %v718 = vpop.f32.mrf.mxu0
    %v719 = vadd.f32 1e-06, %v718
    %v720 = vand.u32 %v616, 4294901760
    %v721 = vsub.f32 %v616, %v720
    %v722 = vand.u32 %v721, 4294901760
    %v723 = vsub.f32 %v721, %v722
    %v724 = vand.u32 %v723, 4294901760
    %725 = vmatmul.f32.gmra.mxu0 %v724
    %v726 = vpop.f32.mrf.mxu0
    %v727 = vadd.f32 1e-06, %v726
    %v728 = vand.u32 %v617, 4294901760
    %v729 = vsub.f32 %v617, %v728
    %v730 = vand.u32 %v729, 4294901760
    %v731 = vsub.f32 %v729, %v730
    %v732 = vand.u32 %v731, 4294901760
    %733 = vmatmul.f32.gmra.mxu0 %v732
    %v734 = vpop.f32.mrf.mxu0
    %v735 = vadd.f32 1e-06, %v734
    %v736 = vand.u32 %v618, 4294901760
    %v737 = vsub.f32 %v618, %v736
    %v738 = vand.u32 %v737, 4294901760
    %v739 = vsub.f32 %v737, %v738
    %v740 = vand.u32 %v739, 4294901760
    %741 = vmatmul.f32.gmra.mxu0 %v740
    %v742 = vpop.f32.mrf.mxu0
    %v743 = vadd.f32 1e-06, %v742
    %v744 = vand.u32 %v619, 4294901760
    %v745 = vsub.f32 %v619, %v744
    %v746 = vand.u32 %v745, 4294901760
    %v747 = vsub.f32 %v745, %v746
    %v748 = vand.u32 %v747, 4294901760
    %749 = vmatmul.f32.gmra.mxu0 %v748
    %v750 = vpop.f32.mrf.mxu0
    %v751 = vadd.f32 1e-06, %v750
    %v752 = vand.u32 %v620, 4294901760
    %v753 = vsub.f32 %v620, %v752
    %v754 = vand.u32 %v753, 4294901760
    %v755 = vsub.f32 %v753, %v754
    %v756 = vand.u32 %v755, 4294901760
    %757 = vmatmul.f32.gmra.mxu0 %v756
    %v758 = vpop.f32.mrf.mxu0
    %v759 = vadd.f32 1e-06, %v758
    %v760 = vand.u32 %v621, 4294901760
    %v761 = vsub.f32 %v621, %v760
    %v762 = vand.u32 %v761, 4294901760
    %v763 = vsub.f32 %v761, %v762
    %v764 = vand.u32 %v763, 4294901760
    %765 = vmatmul.f32.gmra.mxu0 %v764
    %v766 = vpop.f32.mrf.mxu0
    %v767 = vadd.f32 1e-06, %v766
    %v768 = vand.u32 %v622, 4294901760
    %v769 = vsub.f32 %v622, %v768
    %v770 = vand.u32 %v769, 4294901760
    %v771 = vsub.f32 %v769, %v770
    %v772 = vand.u32 %v771, 4294901760
    %773 = vmatmul.f32.gmra.mxu0 %v772
    %v774 = vpop.f32.mrf.mxu0
    %v775 = vadd.f32 1e-06, %v774
    %v776 = vand.u32 %v623, 4294901760
    %v777 = vsub.f32 %v623, %v776
    %v778 = vand.u32 %v777, 4294901760
    %v779 = vsub.f32 %v777, %v778
    %v780 = vand.u32 %v779, 4294901760
    %781 = vmatmul.f32.gmra.mxu0 %v780
    %v782 = vpop.f32.mrf.mxu0
    %v783 = vadd.f32 1e-06, %v782
    %784 = vdwg.mxu0
    %v785 = vand.u32 %v607, 4294901760
    %v786 = vsub.f32 %v607, %v785
    %v787 = vand.u32 %v786, 4294901760
    %v788 = vsub.f32 %v786, %v787
    %v789 = vand.u32 %v788, 4294901760
    %790 = vmatpush.msra.mxu0 %v789
    %v791 = vand.u32 %v606, 4294901760
    %v792 = vsub.f32 %v606, %v791
    %v793 = vand.u32 %v792, 4294901760
    %v794 = vsub.f32 %v792, %v793
    %v795 = vand.u32 %v794, 4294901760
    %796 = vmatpush.msra.mxu0 %v795
    %v797 = vand.u32 %v605, 4294901760
    %v798 = vsub.f32 %v605, %v797
    %v799 = vand.u32 %v798, 4294901760
    %v800 = vsub.f32 %v798, %v799
    %v801 = vand.u32 %v800, 4294901760
    %802 = vmatpush.msra.mxu0 %v801
    %v803 = vand.u32 %v604, 4294901760
    %v804 = vsub.f32 %v604, %v803
    %v805 = vand.u32 %v804, 4294901760
    %v806 = vsub.f32 %v804, %v805
    %v807 = vand.u32 %v806, 4294901760
    %808 = vmatpush.msra.mxu0 %v807
    %v809 = vand.u32 %v603, 4294901760
    %v810 = vsub.f32 %v603, %v809
    %v811 = vand.u32 %v810, 4294901760
    %v812 = vsub.f32 %v810, %v811
    %v813 = vand.u32 %v812, 4294901760
    %814 = vmatpush.msra.mxu0 %v813
    %v815 = vand.u32 %v602, 4294901760
    %v816 = vsub.f32 %v602, %v815
    %v817 = vand.u32 %v816, 4294901760
    %v818 = vsub.f32 %v816, %v817
    %v819 = vand.u32 %v818, 4294901760
    %820 = vmatpush.msra.mxu0 %v819
    %v821 = vand.u32 %v601, 4294901760
    %v822 = vsub.f32 %v601, %v821
    %v823 = vand.u32 %v822, 4294901760
    %v824 = vsub.f32 %v822, %v823
    %v825 = vand.u32 %v824, 4294901760
    %826 = vmatpush.msra.mxu0 %v825
    %v827 = vand.u32 %v600, 4294901760
    %v828 = vsub.f32 %v600, %v827
    %v829 = vand.u32 %v828, 4294901760
    %v830 = vsub.f32 %v828, %v829
    %v831 = vand.u32 %v830, 4294901760
    %832 = vmatpush.msra.mxu0 %v831
    %v833 = vand.u32 %v599, 4294901760
    %v834 = vsub.f32 %v599, %v833
    %v835 = vand.u32 %v834, 4294901760
    %v836 = vsub.f32 %v834, %v835
    %v837 = vand.u32 %v836, 4294901760
    %838 = vmatpush.msra.mxu0 %v837
    %v839 = vand.u32 %v598, 4294901760
    %v840 = vsub.f32 %v598, %v839
    %v841 = vand.u32 %v840, 4294901760
    %v842 = vsub.f32 %v840, %v841
    %v843 = vand.u32 %v842, 4294901760
    %844 = vmatpush.msra.mxu0 %v843
    %v845 = vand.u32 %v597, 4294901760
    %v846 = vsub.f32 %v597, %v845
    %v847 = vand.u32 %v846, 4294901760
    %v848 = vsub.f32 %v846, %v847
    %v849 = vand.u32 %v848, 4294901760
    %850 = vmatpush.msra.mxu0 %v849
    %v851 = vand.u32 %v596, 4294901760
    %v852 = vsub.f32 %v596, %v851
    %v853 = vand.u32 %v852, 4294901760
    %v854 = vsub.f32 %v852, %v853
    %v855 = vand.u32 %v854, 4294901760
    %856 = vmatpush.msra.mxu0 %v855
    %v857 = vand.u32 %v595, 4294901760
    %v858 = vsub.f32 %v595, %v857
    %v859 = vand.u32 %v858, 4294901760
    %v860 = vsub.f32 %v858, %v859
    %v861 = vand.u32 %v860, 4294901760
    %862 = vmatpush.msra.mxu0 %v861
    %v863 = vand.u32 %v594, 4294901760
    %v864 = vsub.f32 %v594, %v863
    %v865 = vand.u32 %v864, 4294901760
    %v866 = vsub.f32 %v864, %v865
    %v867 = vand.u32 %v866, 4294901760
    %868 = vmatpush.msra.mxu0 %v867
    %v869 = vand.u32 %v593, 4294901760
    %v870 = vsub.f32 %v593, %v869
    %v871 = vand.u32 %v870, 4294901760
    %v872 = vsub.f32 %v870, %v871
    %v873 = vand.u32 %v872, 4294901760
    %874 = vmatpush.msra.mxu0 %v873
    %v875 = vand.u32 %v592, 4294901760
    %v876 = vsub.f32 %v592, %v875
    %v877 = vand.u32 %v876, 4294901760
    %v878 = vsub.f32 %v876, %v877
    %v879 = vand.u32 %v878, 4294901760
    %880 = vmatpush.msra.mxu0 %v879
    %v881 = vand.u32 %v608, 4294901760
    %882 = vmatmul.f32.gmra.mxu0 %v881
    %v883 = vpop.f32.mrf.mxu0
    %v884 = vadd.f32 %v663, %v883
    %v885 = vand.u32 %v609, 4294901760
    %886 = vmatmul.f32.gmra.mxu0 %v885
    %v887 = vpop.f32.mrf.mxu0
    %v888 = vadd.f32 %v671, %v887
    %v889 = vand.u32 %v610, 4294901760
    %890 = vmatmul.f32.gmra.mxu0 %v889
    %v891 = vpop.f32.mrf.mxu0
    %v892 = vadd.f32 %v679, %v891
    %v893 = vand.u32 %v611, 4294901760
    %894 = vmatmul.f32.gmra.mxu0 %v893
    %v895 = vpop.f32.mrf.mxu0
    %v896 = vadd.f32 %v687, %v895
    %v897 = vand.u32 %v612, 4294901760
    %898 = vmatmul.f32.gmra.mxu0 %v897
    %v899 = vpop.f32.mrf.mxu0
    %v900 = vadd.f32 %v695, %v899
    %v901 = vand.u32 %v613, 4294901760
    %902 = vmatmul.f32.gmra.mxu0 %v901
    %v903 = vpop.f32.mrf.mxu0
    %v904 = vadd.f32 %v703, %v903
    %v905 = vand.u32 %v614, 4294901760
    %906 = vmatmul.f32.gmra.mxu0 %v905
    %v907 = vpop.f32.mrf.mxu0
    %v908 = vadd.f32 %v711, %v907
    %v909 = vand.u32 %v615, 4294901760
    %910 = vmatmul.f32.gmra.mxu0 %v909
    %v911 = vpop.f32.mrf.mxu0
    %v912 = vadd.f32 %v719, %v911
    %v913 = vand.u32 %v616, 4294901760
    %914 = vmatmul.f32.gmra.mxu0 %v913
    %v915 = vpop.f32.mrf.mxu0
    %v916 = vadd.f32 %v727, %v915
    %v917 = vand.u32 %v617, 4294901760
    %918 = vmatmul.f32.gmra.mxu0 %v917
    %v919 = vpop.f32.mrf.mxu0
    %v920 = vadd.f32 %v735, %v919
    %v921 = vand.u32 %v618, 4294901760
    %922 = vmatmul.f32.gmra.mxu0 %v921
    %v923 = vpop.f32.mrf.mxu0
    %v924 = vadd.f32 %v743, %v923
    %v925 = vand.u32 %v619, 4294901760
    %926 = vmatmul.f32.gmra.mxu0 %v925
    %v927 = vpop.f32.mrf.mxu0
    %v928 = vadd.f32 %v751, %v927
    %v929 = vand.u32 %v620, 4294901760
    %930 = vmatmul.f32.gmra.mxu0 %v929
    %v931 = vpop.f32.mrf.mxu0
    %v932 = vadd.f32 %v759, %v931
    %v933 = vand.u32 %v621, 4294901760
    %934 = vmatmul.f32.gmra.mxu0 %v933
    %v935 = vpop.f32.mrf.mxu0
    %v936 = vadd.f32 %v767, %v935
    %v937 = vand.u32 %v622, 4294901760
    %938 = vmatmul.f32.gmra.mxu0 %v937
    %v939 = vpop.f32.mrf.mxu0
    %v940 = vadd.f32 %v775, %v939
    %v941 = vand.u32 %v623, 4294901760
    %942 = vmatmul.f32.gmra.mxu0 %v941
    %v943 = vpop.f32.mrf.mxu0
    %v944 = vadd.f32 %v783, %v943
    %945 = vdwg.mxu0
    %v946 = vand.u32 %v607, 4294901760
    %v947 = vsub.f32 %v607, %v946
    %948 = vmatpush.msra.mxu0 %v947
    %v949 = vand.u32 %v606, 4294901760
    %v950 = vsub.f32 %v606, %v949
    %951 = vmatpush.msra.mxu0 %v950
    %v952 = vand.u32 %v605, 4294901760
    %v953 = vsub.f32 %v605, %v952
    %954 = vmatpush.msra.mxu0 %v953
    %v955 = vand.u32 %v604, 4294901760
    %v956 = vsub.f32 %v604, %v955
    %957 = vmatpush.msra.mxu0 %v956
    %v958 = vand.u32 %v603, 4294901760
    %v959 = vsub.f32 %v603, %v958
    %960 = vmatpush.msra.mxu0 %v959
    %v961 = vand.u32 %v602, 4294901760
    %v962 = vsub.f32 %v602, %v961
    %963 = vmatpush.msra.mxu0 %v962
    %v964 = vand.u32 %v601, 4294901760
    %v965 = vsub.f32 %v601, %v964
    %966 = vmatpush.msra.mxu0 %v965
    %v967 = vand.u32 %v600, 4294901760
    %v968 = vsub.f32 %v600, %v967
    %969 = vmatpush.msra.mxu0 %v968
    %v970 = vand.u32 %v599, 4294901760
    %v971 = vsub.f32 %v599, %v970
    %972 = vmatpush.msra.mxu0 %v971
    %v973 = vand.u32 %v598, 4294901760
    %v974 = vsub.f32 %v598, %v973
    %975 = vmatpush.msra.mxu0 %v974
    %v976 = vand.u32 %v597, 4294901760
    %v977 = vsub.f32 %v597, %v976
    %978 = vmatpush.msra.mxu0 %v977
    %v979 = vand.u32 %v596, 4294901760
    %v980 = vsub.f32 %v596, %v979
    %981 = vmatpush.msra.mxu0 %v980
    %v982 = vand.u32 %v595, 4294901760
    %v983 = vsub.f32 %v595, %v982
    %984 = vmatpush.msra.mxu0 %v983
    %v985 = vand.u32 %v594, 4294901760
    %v986 = vsub.f32 %v594, %v985
    %987 = vmatpush.msra.mxu0 %v986
    %v988 = vand.u32 %v593, 4294901760
    %v989 = vsub.f32 %v593, %v988
    %990 = vmatpush.msra.mxu0 %v989
    %v991 = vand.u32 %v592, 4294901760
    %v992 = vsub.f32 %v592, %v991
    %993 = vmatpush.msra.mxu0 %v992
    %v994 = vand.u32 %v608, 4294901760
    %v995 = vsub.f32 %v608, %v994
    %996 = vmatmul.f32.gmra.mxu0 %v995
    %v997 = vpop.f32.mrf.mxu0
    %v998 = vadd.f32 %v884, %v997
    %v999 = vand.u32 %v609, 4294901760
    %v1000 = vsub.f32 %v609, %v999
    %1001 = vmatmul.f32.gmra.mxu0 %v1000
    %v1002 = vpop.f32.mrf.mxu0
    %v1003 = vadd.f32 %v888, %v1002
    %v1004 = vand.u32 %v610, 4294901760
    %v1005 = vsub.f32 %v610, %v1004
    %1006 = vmatmul.f32.gmra.mxu0 %v1005
    %v1007 = vpop.f32.mrf.mxu0
    %v1008 = vadd.f32 %v892, %v1007
    %v1009 = vand.u32 %v611, 4294901760
    %v1010 = vsub.f32 %v611, %v1009
    %1011 = vmatmul.f32.gmra.mxu0 %v1010
    %v1012 = vpop.f32.mrf.mxu0
    %v1013 = vadd.f32 %v896, %v1012
    %v1014 = vand.u32 %v612, 4294901760
    %v1015 = vsub.f32 %v612, %v1014
    %1016 = vmatmul.f32.gmra.mxu0 %v1015
    %v1017 = vpop.f32.mrf.mxu0
    %v1018 = vadd.f32 %v900, %v1017
    %v1019 = vand.u32 %v613, 4294901760
    %v1020 = vsub.f32 %v613, %v1019
    %1021 = vmatmul.f32.gmra.mxu0 %v1020
    %v1022 = vpop.f32.mrf.mxu0
    %v1023 = vadd.f32 %v904, %v1022
    %v1024 = vand.u32 %v614, 4294901760
    %v1025 = vsub.f32 %v614, %v1024
    %1026 = vmatmul.f32.gmra.mxu0 %v1025
    %v1027 = vpop.f32.mrf.mxu0
    %v1028 = vadd.f32 %v908, %v1027
    %v1029 = vand.u32 %v615, 4294901760
    %v1030 = vsub.f32 %v615, %v1029
    %1031 = vmatmul.f32.gmra.mxu0 %v1030
    %v1032 = vpop.f32.mrf.mxu0
    %v1033 = vadd.f32 %v912, %v1032
    %v1034 = vand.u32 %v616, 4294901760
    %v1035 = vsub.f32 %v616, %v1034
    %1036 = vmatmul.f32.gmra.mxu0 %v1035
    %v1037 = vpop.f32.mrf.mxu0
    %v1038 = vadd.f32 %v916, %v1037
    %v1039 = vand.u32 %v617, 4294901760
    %v1040 = vsub.f32 %v617, %v1039
    %1041 = vmatmul.f32.gmra.mxu0 %v1040
    %v1042 = vpop.f32.mrf.mxu0
    %v1043 = vadd.f32 %v920, %v1042
    %v1044 = vand.u32 %v618, 4294901760
    %v1045 = vsub.f32 %v618, %v1044
    %1046 = vmatmul.f32.gmra.mxu0 %v1045
    %v1047 = vpop.f32.mrf.mxu0
    %v1048 = vadd.f32 %v924, %v1047
    %v1049 = vand.u32 %v619, 4294901760
    %v1050 = vsub.f32 %v619, %v1049
    %1051 = vmatmul.f32.gmra.mxu0 %v1050
    %v1052 = vpop.f32.mrf.mxu0
    %v1053 = vadd.f32 %v928, %v1052
    %v1054 = vand.u32 %v620, 4294901760
    %v1055 = vsub.f32 %v620, %v1054
    %1056 = vmatmul.f32.gmra.mxu0 %v1055
    %v1057 = vpop.f32.mrf.mxu0
    %v1058 = vadd.f32 %v932, %v1057
    %v1059 = vand.u32 %v621, 4294901760
    %v1060 = vsub.f32 %v621, %v1059
    %1061 = vmatmul.f32.gmra.mxu0 %v1060
    %v1062 = vpop.f32.mrf.mxu0
    %v1063 = vadd.f32 %v936, %v1062
    %v1064 = vand.u32 %v622, 4294901760
    %v1065 = vsub.f32 %v622, %v1064
    %1066 = vmatmul.f32.gmra.mxu0 %v1065
    %v1067 = vpop.f32.mrf.mxu0
    %v1068 = vadd.f32 %v940, %v1067
    %v1069 = vand.u32 %v623, 4294901760
    %v1070 = vsub.f32 %v623, %v1069
    %1071 = vmatmul.f32.gmra.mxu0 %v1070
    %v1072 = vpop.f32.mrf.mxu0
    %v1073 = vadd.f32 %v944, %v1072
    %1074 = vdwg.mxu0
    %v1075 = vand.u32 %v607, 4294901760
    %1076 = vmatpush.msra.mxu0 %v1075
    %v1077 = vand.u32 %v606, 4294901760
    %1078 = vmatpush.msra.mxu0 %v1077
    %v1079 = vand.u32 %v605, 4294901760
    %1080 = vmatpush.msra.mxu0 %v1079
    %v1081 = vand.u32 %v604, 4294901760
    %1082 = vmatpush.msra.mxu0 %v1081
    %v1083 = vand.u32 %v603, 4294901760
    %1084 = vmatpush.msra.mxu0 %v1083
    %v1085 = vand.u32 %v602, 4294901760
    %1086 = vmatpush.msra.mxu0 %v1085
    %v1087 = vand.u32 %v601, 4294901760
    %1088 = vmatpush.msra.mxu0 %v1087
    %v1089 = vand.u32 %v600, 4294901760
    %1090 = vmatpush.msra.mxu0 %v1089
    %v1091 = vand.u32 %v599, 4294901760
    %1092 = vmatpush.msra.mxu0 %v1091
    %v1093 = vand.u32 %v598, 4294901760
    %1094 = vmatpush.msra.mxu0 %v1093
    %v1095 = vand.u32 %v597, 4294901760
    %1096 = vmatpush.msra.mxu0 %v1095
    %v1097 = vand.u32 %v596, 4294901760
    %1098 = vmatpush.msra.mxu0 %v1097
    %v1099 = vand.u32 %v595, 4294901760
    %1100 = vmatpush.msra.mxu0 %v1099
    %v1101 = vand.u32 %v594, 4294901760
    %1102 = vmatpush.msra.mxu0 %v1101
    %v1103 = vand.u32 %v593, 4294901760
    %1104 = vmatpush.msra.mxu0 %v1103
    %v1105 = vand.u32 %v592, 4294901760
    %1106 = vmatpush.msra.mxu0 %v1105
    %v1107 = vand.u32 %v608, 4294901760
    %v1108 = vsub.f32 %v608, %v1107
    %v1109 = vand.u32 %v1108, 4294901760
    %1110 = vmatmul.f32.gmra.mxu0 %v1109
    %v1111 = vpop.f32.mrf.mxu0
    %v1112 = vadd.f32 %v998, %v1111
    %v1113 = vand.u32 %v609, 4294901760
    %v1114 = vsub.f32 %v609, %v1113
    %v1115 = vand.u32 %v1114, 4294901760
    %1116 = vmatmul.f32.gmra.mxu0 %v1115
    %v1117 = vpop.f32.mrf.mxu0
    %v1118 = vadd.f32 %v1003, %v1117
    %v1119 = vand.u32 %v610, 4294901760
    %v1120 = vsub.f32 %v610, %v1119
    %v1121 = vand.u32 %v1120, 4294901760
    %1122 = vmatmul.f32.gmra.mxu0 %v1121
    %v1123 = vpop.f32.mrf.mxu0
    %v1124 = vadd.f32 %v1008, %v1123
    %v1125 = vand.u32 %v611, 4294901760
    %v1126 = vsub.f32 %v611, %v1125
    %v1127 = vand.u32 %v1126, 4294901760
    %1128 = vmatmul.f32.gmra.mxu0 %v1127
    %v1129 = vpop.f32.mrf.mxu0
    %v1130 = vadd.f32 %v1013, %v1129
    %v1131 = vand.u32 %v612, 4294901760
    %v1132 = vsub.f32 %v612, %v1131
    %v1133 = vand.u32 %v1132, 4294901760
    %1134 = vmatmul.f32.gmra.mxu0 %v1133
    %v1135 = vpop.f32.mrf.mxu0
    %v1136 = vadd.f32 %v1018, %v1135
    %v1137 = vand.u32 %v613, 4294901760
    %v1138 = vsub.f32 %v613, %v1137
    %v1139 = vand.u32 %v1138, 4294901760
    %1140 = vmatmul.f32.gmra.mxu0 %v1139
    %v1141 = vpop.f32.mrf.mxu0
    %v1142 = vadd.f32 %v1023, %v1141
    %v1143 = vand.u32 %v614, 4294901760
    %v1144 = vsub.f32 %v614, %v1143
    %v1145 = vand.u32 %v1144, 4294901760
    %1146 = vmatmul.f32.gmra.mxu0 %v1145
    %v1147 = vpop.f32.mrf.mxu0
    %v1148 = vadd.f32 %v1028, %v1147
    %v1149 = vand.u32 %v615, 4294901760
    %v1150 = vsub.f32 %v615, %v1149
    %v1151 = vand.u32 %v1150, 4294901760
    %1152 = vmatmul.f32.gmra.mxu0 %v1151
    %v1153 = vpop.f32.mrf.mxu0
    %v1154 = vadd.f32 %v1033, %v1153
    %v1155 = vand.u32 %v616, 4294901760
    %v1156 = vsub.f32 %v616, %v1155
    %v1157 = vand.u32 %v1156, 4294901760
    %1158 = vmatmul.f32.gmra.mxu0 %v1157
    %v1159 = vpop.f32.mrf.mxu0
    %v1160 = vadd.f32 %v1038, %v1159
    %v1161 = vand.u32 %v617, 4294901760
    %v1162 = vsub.f32 %v617, %v1161
    %v1163 = vand.u32 %v1162, 4294901760
    %1164 = vmatmul.f32.gmra.mxu0 %v1163
    %v1165 = vpop.f32.mrf.mxu0
    %v1166 = vadd.f32 %v1043, %v1165
    %v1167 = vand.u32 %v618, 4294901760
    %v1168 = vsub.f32 %v618, %v1167
    %v1169 = vand.u32 %v1168, 4294901760
    %1170 = vmatmul.f32.gmra.mxu0 %v1169
    %v1171 = vpop.f32.mrf.mxu0
    %v1172 = vadd.f32 %v1048, %v1171
    %v1173 = vand.u32 %v619, 4294901760
    %v1174 = vsub.f32 %v619, %v1173
    %v1175 = vand.u32 %v1174, 4294901760
    %1176 = vmatmul.f32.gmra.mxu0 %v1175
    %v1177 = vpop.f32.mrf.mxu0
    %v1178 = vadd.f32 %v1053, %v1177
    %v1179 = vand.u32 %v620, 4294901760
    %v1180 = vsub.f32 %v620, %v1179
    %v1181 = vand.u32 %v1180, 4294901760
    %1182 = vmatmul.f32.gmra.mxu0 %v1181
    %v1183 = vpop.f32.mrf.mxu0
    %v1184 = vadd.f32 %v1058, %v1183
    %v1185 = vand.u32 %v621, 4294901760
    %v1186 = vsub.f32 %v621, %v1185
    %v1187 = vand.u32 %v1186, 4294901760
    %1188 = vmatmul.f32.gmra.mxu0 %v1187
    %v1189 = vpop.f32.mrf.mxu0
    %v1190 = vadd.f32 %v1063, %v1189
    %v1191 = vand.u32 %v622, 4294901760
    %v1192 = vsub.f32 %v622, %v1191
    %v1193 = vand.u32 %v1192, 4294901760
    %1194 = vmatmul.f32.gmra.mxu0 %v1193
    %v1195 = vpop.f32.mrf.mxu0
    %v1196 = vadd.f32 %v1068, %v1195
    %v1197 = vand.u32 %v623, 4294901760
    %v1198 = vsub.f32 %v623, %v1197
    %v1199 = vand.u32 %v1198, 4294901760
    %1200 = vmatmul.f32.gmra.mxu0 %v1199
    %v1201 = vpop.f32.mrf.mxu0
    %v1202 = vadd.f32 %v1073, %v1201
    %1203 = vdwg.mxu0
    %v1204 = vand.u32 %v607, 4294901760
    %v1205 = vsub.f32 %v607, %v1204
    %v1206 = vand.u32 %v1205, 4294901760
    %1207 = vmatpush.msra.mxu0 %v1206
    %v1208 = vand.u32 %v606, 4294901760
    %v1209 = vsub.f32 %v606, %v1208
    %v1210 = vand.u32 %v1209, 4294901760
    %1211 = vmatpush.msra.mxu0 %v1210
    %v1212 = vand.u32 %v605, 4294901760
    %v1213 = vsub.f32 %v605, %v1212
    %v1214 = vand.u32 %v1213, 4294901760
    %1215 = vmatpush.msra.mxu0 %v1214
    %v1216 = vand.u32 %v604, 4294901760
    %v1217 = vsub.f32 %v604, %v1216
    %v1218 = vand.u32 %v1217, 4294901760
    %1219 = vmatpush.msra.mxu0 %v1218
    %v1220 = vand.u32 %v603, 4294901760
    %v1221 = vsub.f32 %v603, %v1220
    %v1222 = vand.u32 %v1221, 4294901760
    %1223 = vmatpush.msra.mxu0 %v1222
    %v1224 = vand.u32 %v602, 4294901760
    %v1225 = vsub.f32 %v602, %v1224
    %v1226 = vand.u32 %v1225, 4294901760
    %1227 = vmatpush.msra.mxu0 %v1226
    %v1228 = vand.u32 %v601, 4294901760
    %v1229 = vsub.f32 %v601, %v1228
    %v1230 = vand.u32 %v1229, 4294901760
    %1231 = vmatpush.msra.mxu0 %v1230
    %v1232 = vand.u32 %v600, 4294901760
    %v1233 = vsub.f32 %v600, %v1232
    %v1234 = vand.u32 %v1233, 4294901760
    %1235 = vmatpush.msra.mxu0 %v1234
    %v1236 = vand.u32 %v599, 4294901760
    %v1237 = vsub.f32 %v599, %v1236
    %v1238 = vand.u32 %v1237, 4294901760
    %1239 = vmatpush.msra.mxu0 %v1238
    %v1240 = vand.u32 %v598, 4294901760
    %v1241 = vsub.f32 %v598, %v1240
    %v1242 = vand.u32 %v1241, 4294901760
    %1243 = vmatpush.msra.mxu0 %v1242
    %v1244 = vand.u32 %v597, 4294901760
    %v1245 = vsub.f32 %v597, %v1244
    %v1246 = vand.u32 %v1245, 4294901760
    %1247 = vmatpush.msra.mxu0 %v1246
    %v1248 = vand.u32 %v596, 4294901760
    %v1249 = vsub.f32 %v596, %v1248
    %v1250 = vand.u32 %v1249, 4294901760
    %1251 = vmatpush.msra.mxu0 %v1250
    %v1252 = vand.u32 %v595, 4294901760
    %v1253 = vsub.f32 %v595, %v1252
    %v1254 = vand.u32 %v1253, 4294901760
    %1255 = vmatpush.msra.mxu0 %v1254
    %v1256 = vand.u32 %v594, 4294901760
    %v1257 = vsub.f32 %v594, %v1256
    %v1258 = vand.u32 %v1257, 4294901760
    %1259 = vmatpush.msra.mxu0 %v1258
    %v1260 = vand.u32 %v593, 4294901760
    %v1261 = vsub.f32 %v593, %v1260
    %v1262 = vand.u32 %v1261, 4294901760
    %1263 = vmatpush.msra.mxu0 %v1262
    %v1264 = vand.u32 %v592, 4294901760
    %v1265 = vsub.f32 %v592, %v1264
    %v1266 = vand.u32 %v1265, 4294901760
    %1267 = vmatpush.msra.mxu0 %v1266
    %v1268 = vand.u32 %v608, 4294901760
    %1269 = vmatmul.f32.gmra.mxu0 %v1268
    %v1270 = vpop.f32.mrf.mxu0
    %v1271 = vadd.f32 %v1112, %v1270
    %v1272 = vand.u32 %v609, 4294901760
    %1273 = vmatmul.f32.gmra.mxu0 %v1272
    %v1274 = vpop.f32.mrf.mxu0
    %v1275 = vadd.f32 %v1118, %v1274
    %v1276 = vand.u32 %v610, 4294901760
    %1277 = vmatmul.f32.gmra.mxu0 %v1276
    %v1278 = vpop.f32.mrf.mxu0
    %v1279 = vadd.f32 %v1124, %v1278
    %v1280 = vand.u32 %v611, 4294901760
    %1281 = vmatmul.f32.gmra.mxu0 %v1280
    %v1282 = vpop.f32.mrf.mxu0
    %v1283 = vadd.f32 %v1130, %v1282
    %v1284 = vand.u32 %v612, 4294901760
    %1285 = vmatmul.f32.gmra.mxu0 %v1284
    %v1286 = vpop.f32.mrf.mxu0
    %v1287 = vadd.f32 %v1136, %v1286
    %v1288 = vand.u32 %v613, 4294901760
    %1289 = vmatmul.f32.gmra.mxu0 %v1288
    %v1290 = vpop.f32.mrf.mxu0
    %v1291 = vadd.f32 %v1142, %v1290
    %v1292 = vand.u32 %v614, 4294901760
    %1293 = vmatmul.f32.gmra.mxu0 %v1292
    %v1294 = vpop.f32.mrf.mxu0
    %v1295 = vadd.f32 %v1148, %v1294
    %v1296 = vand.u32 %v615, 4294901760
    %1297 = vmatmul.f32.gmra.mxu0 %v1296
    %v1298 = vpop.f32.mrf.mxu0
    %v1299 = vadd.f32 %v1154, %v1298
    %v1300 = vand.u32 %v616, 4294901760
    %1301 = vmatmul.f32.gmra.mxu0 %v1300
    %v1302 = vpop.f32.mrf.mxu0
    %v1303 = vadd.f32 %v1160, %v1302
    %v1304 = vand.u32 %v617, 4294901760
    %1305 = vmatmul.f32.gmra.mxu0 %v1304
    %v1306 = vpop.f32.mrf.mxu0
    %v1307 = vadd.f32 %v1166, %v1306
    %v1308 = vand.u32 %v618, 4294901760
    %1309 = vmatmul.f32.gmra.mxu0 %v1308
    %v1310 = vpop.f32.mrf.mxu0
    %v1311 = vadd.f32 %v1172, %v1310
    %v1312 = vand.u32 %v619, 4294901760
    %1313 = vmatmul.f32.gmra.mxu0 %v1312
    %v1314 = vpop.f32.mrf.mxu0
    %v1315 = vadd.f32 %v1178, %v1314
    %v1316 = vand.u32 %v620, 4294901760
    %1317 = vmatmul.f32.gmra.mxu0 %v1316
    %v1318 = vpop.f32.mrf.mxu0
    %v1319 = vadd.f32 %v1184, %v1318
    %v1320 = vand.u32 %v621, 4294901760
    %1321 = vmatmul.f32.gmra.mxu0 %v1320
    %v1322 = vpop.f32.mrf.mxu0
    %v1323 = vadd.f32 %v1190, %v1322
    %v1324 = vand.u32 %v622, 4294901760
    %1325 = vmatmul.f32.gmra.mxu0 %v1324
    %v1326 = vpop.f32.mrf.mxu0
    %v1327 = vadd.f32 %v1196, %v1326
    %v1328 = vand.u32 %v623, 4294901760
    %1329 = vmatmul.f32.gmra.mxu0 %v1328
    %v1330 = vpop.f32.mrf.mxu0
    %v1331 = vadd.f32 %v1202, %v1330
    %1332 = vdwg.mxu0
    %v1333 = vand.u32 %v607, 4294901760
    %1334 = vmatpush.msra.mxu0 %v1333
    %v1335 = vand.u32 %v606, 4294901760
    %1336 = vmatpush.msra.mxu0 %v1335
    %v1337 = vand.u32 %v605, 4294901760
    %1338 = vmatpush.msra.mxu0 %v1337
    %v1339 = vand.u32 %v604, 4294901760
    %1340 = vmatpush.msra.mxu0 %v1339
    %v1341 = vand.u32 %v603, 4294901760
    %1342 = vmatpush.msra.mxu0 %v1341
    %v1343 = vand.u32 %v602, 4294901760
    %1344 = vmatpush.msra.mxu0 %v1343
    %v1345 = vand.u32 %v601, 4294901760
    %1346 = vmatpush.msra.mxu0 %v1345
    %v1347 = vand.u32 %v600, 4294901760
    %1348 = vmatpush.msra.mxu0 %v1347
    %v1349 = vand.u32 %v599, 4294901760
    %1350 = vmatpush.msra.mxu0 %v1349
    %v1351 = vand.u32 %v598, 4294901760
    %1352 = vmatpush.msra.mxu0 %v1351
    %v1353 = vand.u32 %v597, 4294901760
    %1354 = vmatpush.msra.mxu0 %v1353
    %v1355 = vand.u32 %v596, 4294901760
    %1356 = vmatpush.msra.mxu0 %v1355
    %v1357 = vand.u32 %v595, 4294901760
    %1358 = vmatpush.msra.mxu0 %v1357
    %v1359 = vand.u32 %v594, 4294901760
    %1360 = vmatpush.msra.mxu0 %v1359
    %v1361 = vand.u32 %v593, 4294901760
    %1362 = vmatpush.msra.mxu0 %v1361
    %v1363 = vand.u32 %v592, 4294901760
    %1364 = vmatpush.msra.mxu0 %v1363
    %v1365 = vand.u32 %v608, 4294901760
    %1366 = vmatmul.f32.gmra.mxu0 %v1365
    %v1367 = vpop.f32.mrf.mxu0
    %v1368 = vadd.f32 %v1271, %v1367
    %v1369 = vand.u32 %v609, 4294901760
    %1370 = vmatmul.f32.gmra.mxu0 %v1369
    %v1371 = vpop.f32.mrf.mxu0
    %v1372 = vadd.f32 %v1275, %v1371
    %v1373 = vand.u32 %v610, 4294901760
    %1374 = vmatmul.f32.gmra.mxu0 %v1373
    %v1375 = vpop.f32.mrf.mxu0
    %v1376 = vadd.f32 %v1279, %v1375
    %v1377 = vand.u32 %v611, 4294901760
    %1378 = vmatmul.f32.gmra.mxu0 %v1377
    %v1379 = vpop.f32.mrf.mxu0
    %v1380 = vadd.f32 %v1283, %v1379
    %v1381 = vand.u32 %v612, 4294901760
    %1382 = vmatmul.f32.gmra.mxu0 %v1381
    %v1383 = vpop.f32.mrf.mxu0
    %v1384 = vadd.f32 %v1287, %v1383
    %v1385 = vand.u32 %v613, 4294901760
    %1386 = vmatmul.f32.gmra.mxu0 %v1385
    %v1387 = vpop.f32.mrf.mxu0
    %v1388 = vadd.f32 %v1291, %v1387
    %v1389 = vand.u32 %v614, 4294901760
    %1390 = vmatmul.f32.gmra.mxu0 %v1389
    %v1391 = vpop.f32.mrf.mxu0
    %v1392 = vadd.f32 %v1295, %v1391
    %v1393 = vand.u32 %v615, 4294901760
    %1394 = vmatmul.f32.gmra.mxu0 %v1393
    %v1395 = vpop.f32.mrf.mxu0
    %v1396 = vadd.f32 %v1299, %v1395
    %v1397 = vand.u32 %v616, 4294901760
    %1398 = vmatmul.f32.gmra.mxu0 %v1397
    %v1399 = vpop.f32.mrf.mxu0
    %v1400 = vadd.f32 %v1303, %v1399
    %v1401 = vand.u32 %v617, 4294901760
    %1402 = vmatmul.f32.gmra.mxu0 %v1401
    %v1403 = vpop.f32.mrf.mxu0
    %v1404 = vadd.f32 %v1307, %v1403
    %v1405 = vand.u32 %v618, 4294901760
    %1406 = vmatmul.f32.gmra.mxu0 %v1405
    %v1407 = vpop.f32.mrf.mxu0
    %v1408 = vadd.f32 %v1311, %v1407
    %v1409 = vand.u32 %v619, 4294901760
    %1410 = vmatmul.f32.gmra.mxu0 %v1409
    %v1411 = vpop.f32.mrf.mxu0
    %v1412 = vadd.f32 %v1315, %v1411
    %v1413 = vand.u32 %v620, 4294901760
    %1414 = vmatmul.f32.gmra.mxu0 %v1413
    %v1415 = vpop.f32.mrf.mxu0
    %v1416 = vadd.f32 %v1319, %v1415
    %v1417 = vand.u32 %v621, 4294901760
    %1418 = vmatmul.f32.gmra.mxu0 %v1417
    %v1419 = vpop.f32.mrf.mxu0
    %v1420 = vadd.f32 %v1323, %v1419
    %v1421 = vand.u32 %v622, 4294901760
    %1422 = vmatmul.f32.gmra.mxu0 %v1421
    %v1423 = vpop.f32.mrf.mxu0
    %v1424 = vadd.f32 %v1327, %v1423
    %v1425 = vand.u32 %v623, 4294901760
    %1426 = vmatmul.f32.gmra.mxu0 %v1425
    %v1427 = vpop.f32.mrf.mxu0
    %v1428 = vadd.f32 %v1331, %v1427
    %1429 = vdwg.mxu0
    %v1430 = vlog2.pop %v1368
    %v1431 = vmul.f32 %v1430, 0.6931472
    %v1432 = vlog2.pop %v1372
    %v1433 = vmul.f32 %v1432, 0.6931472
    %v1434 = vlog2.pop %v1376
    %v1435 = vmul.f32 %v1434, 0.6931472
    %v1436 = vlog2.pop %v1380
    %v1437 = vmul.f32 %v1436, 0.6931472
    %v1438 = vlog2.pop %v1384
    %v1439 = vmul.f32 %v1438, 0.6931472
    %v1440 = vlog2.pop %v1388
    %v1441 = vmul.f32 %v1440, 0.6931472
    %v1442 = vlog2.pop %v1392
    %v1443 = vmul.f32 %v1442, 0.6931472
    %v1444 = vlog2.pop %v1396
    %v1445 = vmul.f32 %v1444, 0.6931472
    %v1446 = vlog2.pop %v1400
    %v1447 = vmul.f32 %v1446, 0.6931472
    %v1448 = vlog2.pop %v1404
    %v1449 = vmul.f32 %v1448, 0.6931472
    %v1450 = vlog2.pop %v1408
    %v1451 = vmul.f32 %v1450, 0.6931472
    %v1452 = vlog2.pop %v1412
    %v1453 = vmul.f32 %v1452, 0.6931472
    %v1454 = vlog2.pop %v1416
    %v1455 = vmul.f32 %v1454, 0.6931472
    %v1456 = vlog2.pop %v1420
    %v1457 = vmul.f32 %v1456, 0.6931472
    %v1458 = vlog2.pop %v1424
    %v1459 = vmul.f32 %v1458, 0.6931472
    %v1460 = vlog2.pop %v1428
    %v1461 = vmul.f32 %v1460, 0.6931472
    %1462 = vst [vmem:[#allocation8] sm:$0xff] %v1431
    %1463 = vst [vmem:[#allocation8 + $0x8] sm:$0xff] %v1433
    %1464 = vst [vmem:[#allocation8 + $0x10] sm:$0xff] %v1435
    %1465 = vst [vmem:[#allocation8 + $0x18] sm:$0xff] %v1437
    %1466 = vst [vmem:[#allocation8 + $0x20] sm:$0xff] %v1439
    %1467 = vst [vmem:[#allocation8 + $0x28] sm:$0xff] %v1441
    %1468 = vst [vmem:[#allocation8 + $0x30] sm:$0xff] %v1443
    %1469 = vst [vmem:[#allocation8 + $0x38] sm:$0xff] %v1445
    %1470 = vst [vmem:[#allocation8 + $0x40] sm:$0xff] %v1447
    %1471 = vst [vmem:[#allocation8 + $0x48] sm:$0xff] %v1449
    %1472 = vst [vmem:[#allocation8 + $0x50] sm:$0xff] %v1451
    %1473 = vst [vmem:[#allocation8 + $0x58] sm:$0xff] %v1453
    %1474 = vst [vmem:[#allocation8 + $0x60] sm:$0xff] %v1455
    %1475 = vst [vmem:[#allocation8 + $0x68] sm:$0xff] %v1457
    %1476 = vst [vmem:[#allocation8 + $0x70] sm:$0xff] %v1459
    %1477 = vst [vmem:[#allocation8 + $0x78] sm:$0xff] %v1461
    // Predicated region
    $region26: #{tpu_custom_call.1} parent=1 // pred_check
      _
    $region27: #{tpu_custom_call.1} parent=1 // pred_check_branch
      %1479 = sbr.rel (0) target = $region29
    $region28: #{tpu_custom_call.1} parent=1 // pred_region
      %1481 = vsyncadd [#allocation4], 0
      %s1482 = sshll.u32 [#allocation8], 4
      %s1483 = int_to_ptr.vmem [resolvable:$true] %s1482
      %s1484 = sshll.u32 %s3, 4
      %s1485 = int_to_ptr.hbm [resolvable:$true] %s1484
      %1490 = dma.vmem_to_hbm [thread:$0]  %s1483, 2048, %s1485, [#allocation4], 128, 128, 8
    $region29: #{tpu_custom_call.1} parent=1 // pred_fallthru
      _
    // Predicated region
    $region30: #{tpu_custom_call.1} parent=1 // pred_check
      _
    $region31: #{tpu_custom_call.1} parent=1 // pred_check_branch
      %1492 = sbr.rel (0) target = $region33
    $region32: #{tpu_custom_call.1} parent=1 // pred_region
      %1494 = dma.done [#allocation4], 2048
    $region33: #{tpu_custom_call.1} parent=1 // pred_fallthru
      _
    %1495 = vsyncpa [#allocation3], 1
    %1496 = vsyncpa [#allocation6], 1
    %1497 = vsyncpa [#allocation4], 1

// kernel: tpu_custom_call.1
$region0: #{tpu_custom_call.1}
  #allocation0 [shape = 'u32[]', space=smem, size = 0x4, offset = 0x4, fixed_abs, tag = 'smem constant byte address 0x4 - core index']
  #allocation1 [shape = 'u32[72,128]{1,0:T(1,128)}', space=vmem, size = 0x9000, scoped, tag = 'internal scratch']
  %s0 = inlined_call_operand.hbm [shape: bf16[256,128], index: 0, kind: input, shape index: {}]
  %s1 = inlined_call_operand.hbm [shape: bf16[256,256], index: 1, kind: input, shape index: {}]
  %s2 = inlined_call_operand.hbm [shape: f32[128,128], index: 2, kind: input, shape index: {}]
  %s3 = inlined_call_operand.hbm [shape: f32[128,128], index: 3, kind: output, shape index: {}]
  %s4 = sld [smem:[#allocation0]]
  $region34: #{tpu_custom_call.1} parent=0
    _
  %s6 = ssub.s32 1, %s4
  %s7 = scalar_select 0, %s6, %s4
  $region1: #{tpu_custom_call.1} parent=0
    #allocation2 [shape = 'u8[65536]{0}', space=vmem, size = 0x10000, scoped, tag = 'input window, operand 0, single buffered']
    #allocation3 [shape = 's32[1]{0}', space=sflag, size = 0x4, scoped, tag = 'scoped memory for tpu_custom_call.1']
    #allocation4 [shape = 's32[1]{0}', space=sflag, size = 0x4, scoped, tag = 'scoped memory for tpu_custom_call.1']
    #allocation5 [shape = 'u8[131072]{0}', space=vmem, size = 0x20000, scoped, tag = 'input window, operand 1, single buffered']
    #allocation6 [shape = 's32[1]{0}', space=sflag, size = 0x4, scoped, tag = 'scoped memory for tpu_custom_call.1']
    #allocation7 [shape = 'u8[65536]{0}', space=vmem, size = 0x10000, scoped, tag = 'input window, operand 2, single buffered']
    #allocation8 [shape = 'u8[65536]{0}', space=vmem, size = 0x10000, scoped, tag = 'output window, operand 0, single buffered']
    %8 = vsyncpa [#allocation3], 0
    %9 = vsyncpa [#allocation6], 0
    %10 = vsyncpa [#allocation4], 0
    // Predicated region
    $region2: #{tpu_custom_call.1} parent=1 // pred_check
      _
    $region3: #{tpu_custom_call.1} parent=1 // pred_check_branch
      %12 = sbr.rel (0) target = $region5
    $region4: #{tpu_custom_call.1} parent=1 // pred_region
      %14 = vsyncadd [#allocation3], 0
      %s15 = sshll.u32 %s0, 4
      %s16 = int_to_ptr.hbm [resolvable:$true] %s15
      %s17 = sshll.u32 [#allocation2], 4
      %s18 = int_to_ptr.vmem [resolvable:$true] %s17
      %23 = dma.hbm_to_vmem [thread:$0]  %s16, 2048, %s18, [#allocation3], 64, 64, 4
    $region5: #{tpu_custom_call.1} parent=1 // pred_fallthru
      _
    // Predicated region
    $region6: #{tpu_custom_call.1} parent=1 // pred_check
      _
    $region7: #{tpu_custom_call.1} parent=1 // pred_check_branch
      %25 = sbr.rel (0) target = $region9
    $region8: #{tpu_custom_call.1} parent=1 // pred_region
      %27 = vsyncadd [#allocation6], 0
      %s28 = sshll.u32 %s1, 4
      %s29 = int_to_ptr.hbm [resolvable:$true] %s28
      %s30 = sshll.u32 [#allocation5], 4
      %s31 = int_to_ptr.vmem [resolvable:$true] %s30
      %36 = dma.hbm_to_vmem [thread:$0]  %s29, 4096, %s31, [#allocation6], 128, 128, 8
    $region9: #{tpu_custom_call.1} parent=1 // pred_fallthru
      _
    // Predicated region
    $region10: #{tpu_custom_call.1} parent=1 // pred_check
      _
    $region11: #{tpu_custom_call.1} parent=1 // pred_check_branch
      %38 = sbr.rel (0) target = $region13
    $region12: #{tpu_custom_call.1} parent=1 // pred_region
      %40 = vsyncadd [#allocation6], 0
      %s41 = sshll.u32 %s2, 4
      %s42 = int_to_ptr.hbm [resolvable:$true] %s41
      %s43 = sshll.u32 [#allocation7], 4
      %s44 = int_to_ptr.vmem [resolvable:$true] %s43
      %49 = dma.hbm_to_vmem [thread:$0]  %s42, 2048, %s44, [#allocation6], 128, 128, 8
    $region13: #{tpu_custom_call.1} parent=1 // pred_fallthru
      _
    // Predicated region
    $region14: #{tpu_custom_call.1} parent=1 // pred_check
      _
    $region15: #{tpu_custom_call.1} parent=1 // pred_check_branch
      %51 = sbr.rel (0) target = $region17
    $region16: #{tpu_custom_call.1} parent=1 // pred_region
      %53 = dma.done [#allocation3], 2048
    $region17: #{tpu_custom_call.1} parent=1 // pred_fallthru
      _
    // Predicated region
    $region18: #{tpu_custom_call.1} parent=1 // pred_check
      _
    $region19: #{tpu_custom_call.1} parent=1 // pred_check_branch
      %55 = sbr.rel (0) target = $region21
    $region20: #{tpu_custom_call.1} parent=1 // pred_region
      %57 = dma.done [#allocation6], 4096
    $region21: #{tpu_custom_call.1} parent=1 // pred_fallthru
      _
    // Predicated region
    $region22: #{tpu_custom_call.1} parent=1 // pred_check
      _
    $region23: #{tpu_custom_call.1} parent=1 // pred_check_branch
      %59 = sbr.rel (0) target = $region25
    $region24: #{tpu_custom_call.1} parent=1 // pred_region
      %61 = dma.done [#allocation6], 2048
    $region25: #{tpu_custom_call.1} parent=1 // pred_fallthru
      _
    %v62 = vld [vmem:[#allocation5] sm:$0xff]
    %v63 = vld [vmem:[#allocation5 + $0x8] sm:$0xff]
    %v64 = vld [vmem:[#allocation5 + $0x10] sm:$0xff]
    %v65 = vld [vmem:[#allocation5 + $0x18] sm:$0xff]
    %v66 = vld [vmem:[#allocation5 + $0x20] sm:$0xff]
    %v67 = vld [vmem:[#allocation5 + $0x28] sm:$0xff]
    %v68 = vld [vmem:[#allocation5 + $0x30] sm:$0xff]
    %v69 = vld [vmem:[#allocation5 + $0x38] sm:$0xff]
    %v70 = vld [vmem:[#allocation5 + $0x40] sm:$0xff]
    %v71 = vld [vmem:[#allocation5 + $0x48] sm:$0xff]
    %v72 = vld [vmem:[#allocation5 + $0x50] sm:$0xff]
    %v73 = vld [vmem:[#allocation5 + $0x58] sm:$0xff]
    %v74 = vld [vmem:[#allocation5 + $0x60] sm:$0xff]
    %v75 = vld [vmem:[#allocation5 + $0x68] sm:$0xff]
    %v76 = vld [vmem:[#allocation5 + $0x70] sm:$0xff]
    %v77 = vld [vmem:[#allocation5 + $0x78] sm:$0xff]
    %v78 = vld [vmem:[#allocation5 + $0x80] sm:$0xff]
    %v79 = vld [vmem:[#allocation5 + $0x88] sm:$0xff]
    %v80 = vld [vmem:[#allocation5 + $0x90] sm:$0xff]
    %v81 = vld [vmem:[#allocation5 + $0x98] sm:$0xff]
    %v82 = vld [vmem:[#allocation5 + $0xa0] sm:$0xff]
    %v83 = vld [vmem:[#allocation5 + $0xa8] sm:$0xff]
    %v84 = vld [vmem:[#allocation5 + $0xb0] sm:$0xff]
    %v85 = vld [vmem:[#allocation5 + $0xb8] sm:$0xff]
    %v86 = vld [vmem:[#allocation5 + $0xc0] sm:$0xff]
    %v87 = vld [vmem:[#allocation5 + $0xc8] sm:$0xff]
    %v88 = vld [vmem:[#allocation5 + $0xd0] sm:$0xff]
    %v89 = vld [vmem:[#allocation5 + $0xd8] sm:$0xff]
    %v90 = vld [vmem:[#allocation5 + $0xe0] sm:$0xff]
    %v91 = vld [vmem:[#allocation5 + $0xe8] sm:$0xff]
    %v92 = vld [vmem:[#allocation5 + $0xf0] sm:$0xff]
    %v93 = vld [vmem:[#allocation5 + $0xf8] sm:$0xff]
    %v94 = vld [vmem:[#allocation2] sm:$0xf]
    %v95 = vld [vmem:[#allocation2 + $0x4] sm:$0xf]
    %v96 = vld [vmem:[#allocation2 + $0x8] sm:$0xf]
    %v97 = vld [vmem:[#allocation2 + $0xc] sm:$0xf]
    %v98 = vld [vmem:[#allocation2 + $0x10] sm:$0xf]
    %v99 = vld [vmem:[#allocation2 + $0x14] sm:$0xf]
    %v100 = vld [vmem:[#allocation2 + $0x18] sm:$0xf]
    %v101 = vld [vmem:[#allocation2 + $0x1c] sm:$0xf]
    %v102 = vld [vmem:[#allocation2 + $0x20] sm:$0xf]
    %v103 = vld [vmem:[#allocation2 + $0x24] sm:$0xf]
    %v104 = vld [vmem:[#allocation2 + $0x28] sm:$0xf]
    %v105 = vld [vmem:[#allocation2 + $0x2c] sm:$0xf]
    %v106 = vld [vmem:[#allocation2 + $0x30] sm:$0xf]
    %v107 = vld [vmem:[#allocation2 + $0x34] sm:$0xf]
    %v108 = vld [vmem:[#allocation2 + $0x38] sm:$0xf]
    %v109 = vld [vmem:[#allocation2 + $0x3c] sm:$0xf]
    %v110 = vld [vmem:[#allocation2 + $0x40] sm:$0xf]
    %v111 = vld [vmem:[#allocation2 + $0x44] sm:$0xf]
    %v112 = vld [vmem:[#allocation2 + $0x48] sm:$0xf]
    %v113 = vld [vmem:[#allocation2 + $0x4c] sm:$0xf]
    %v114 = vld [vmem:[#allocation2 + $0x50] sm:$0xf]
    %v115 = vld [vmem:[#allocation2 + $0x54] sm:$0xf]
    %v116 = vld [vmem:[#allocation2 + $0x58] sm:$0xf]
    %v117 = vld [vmem:[#allocation2 + $0x5c] sm:$0xf]
    %v118 = vld [vmem:[#allocation2 + $0x60] sm:$0xf]
    %v119 = vld [vmem:[#allocation2 + $0x64] sm:$0xf]
    %v120 = vld [vmem:[#allocation2 + $0x68] sm:$0xf]
    %v121 = vld [vmem:[#allocation2 + $0x6c] sm:$0xf]
    %v122 = vld [vmem:[#allocation2 + $0x70] sm:$0xf]
    %v123 = vld [vmem:[#allocation2 + $0x74] sm:$0xf]
    %v124 = vld [vmem:[#allocation2 + $0x78] sm:$0xf]
    %v125 = vld [vmem:[#allocation2 + $0x7c] sm:$0xf]
    %v158 = vunpack.c.l.b16 %v62
    %v159 = vunpack.c.h.b16 %v62
    %v160 = vunpack.c.l.b16 %v63
    %v161 = vunpack.c.h.b16 %v63
    %v162 = vunpack.c.l.b16 %v64
    %v163 = vunpack.c.h.b16 %v64
    %v164 = vunpack.c.l.b16 %v65
    %v165 = vunpack.c.h.b16 %v65
    %v166 = vunpack.c.l.b16 %v66
    %v167 = vunpack.c.h.b16 %v66
    %v168 = vunpack.c.l.b16 %v67
    %v169 = vunpack.c.h.b16 %v67
    %v170 = vunpack.c.l.b16 %v68
    %v171 = vunpack.c.h.b16 %v68
    %v172 = vunpack.c.l.b16 %v69
    %v173 = vunpack.c.h.b16 %v69
    %v174 = vunpack.c.l.b16 %v70
    %v175 = vunpack.c.h.b16 %v70
    %v176 = vunpack.c.l.b16 %v71
    %v177 = vunpack.c.h.b16 %v71
    %v178 = vunpack.c.l.b16 %v72
    %v179 = vunpack.c.h.b16 %v72
    %v180 = vunpack.c.l.b16 %v73
    %v181 = vunpack.c.h.b16 %v73
    %v182 = vunpack.c.l.b16 %v74
    %v183 = vunpack.c.h.b16 %v74
    %v184 = vunpack.c.l.b16 %v75
    %v185 = vunpack.c.h.b16 %v75
    %v186 = vunpack.c.l.b16 %v76
    %v187 = vunpack.c.h.b16 %v76
    %v188 = vunpack.c.l.b16 %v77
    %v189 = vunpack.c.h.b16 %v77
    %v190 = vunpack.c.l.b16 %v78
    %v191 = vunpack.c.h.b16 %v78
    %v192 = vunpack.c.l.b16 %v79
    %v193 = vunpack.c.h.b16 %v79
    %v194 = vunpack.c.l.b16 %v80
    %v195 = vunpack.c.h.b16 %v80
    %v196 = vunpack.c.l.b16 %v81
    %v197 = vunpack.c.h.b16 %v81
    %v198 = vunpack.c.l.b16 %v82
    %v199 = vunpack.c.h.b16 %v82
    %v200 = vunpack.c.l.b16 %v83
    %v201 = vunpack.c.h.b16 %v83
    %v202 = vunpack.c.l.b16 %v84
    %v203 = vunpack.c.h.b16 %v84
    %v204 = vunpack.c.l.b16 %v85
    %v205 = vunpack.c.h.b16 %v85
    %v206 = vunpack.c.l.b16 %v86
    %v207 = vunpack.c.h.b16 %v86
    %v208 = vunpack.c.l.b16 %v87
    %v209 = vunpack.c.h.b16 %v87
    %v210 = vunpack.c.l.b16 %v88
    %v211 = vunpack.c.h.b16 %v88
    %v212 = vunpack.c.l.b16 %v89
    %v213 = vunpack.c.h.b16 %v89
    %v214 = vunpack.c.l.b16 %v90
    %v215 = vunpack.c.h.b16 %v90
    %v216 = vunpack.c.l.b16 %v91
    %v217 = vunpack.c.h.b16 %v91
    %v218 = vunpack.c.l.b16 %v92
    %v219 = vunpack.c.h.b16 %v92
    %v220 = vunpack.c.l.b16 %v93
    %v221 = vunpack.c.h.b16 %v93
    %v222 = vpack.c.b16 %v160, %v158
    %v223 = vpack.c.b16 %v161, %v159
    %v224 = vpack.c.b16 %v164, %v162
    %v225 = vpack.c.b16 %v165, %v163
    %v226 = vpack.c.b16 %v168, %v166
    %v227 = vpack.c.b16 %v169, %v167
    %v228 = vpack.c.b16 %v172, %v170
    %v229 = vpack.c.b16 %v173, %v171
    %v230 = vpack.c.b16 %v176, %v174
    %v231 = vpack.c.b16 %v177, %v175
    %v232 = vpack.c.b16 %v180, %v178
    %v233 = vpack.c.b16 %v181, %v179
    %v234 = vpack.c.b16 %v184, %v182
    %v235 = vpack.c.b16 %v185, %v183
    %v236 = vpack.c.b16 %v188, %v186
    %v237 = vpack.c.b16 %v189, %v187
    %v238 = vpack.c.b16 %v192, %v190
    %v239 = vpack.c.b16 %v193, %v191
    %v240 = vpack.c.b16 %v196, %v194
    %v241 = vpack.c.b16 %v197, %v195
    %v242 = vpack.c.b16 %v200, %v198
    %v243 = vpack.c.b16 %v201, %v199
    %v244 = vpack.c.b16 %v204, %v202
    %v245 = vpack.c.b16 %v205, %v203
    %v246 = vpack.c.b16 %v208, %v206
    %v247 = vpack.c.b16 %v209, %v207
    %v248 = vpack.c.b16 %v212, %v210
    %v249 = vpack.c.b16 %v213, %v211
    %v250 = vpack.c.b16 %v216, %v214
    %v251 = vpack.c.b16 %v217, %v215
    %v252 = vpack.c.b16 %v220, %v218
    %v253 = vpack.c.b16 %v221, %v219
    %v318 = vunpack.c.l.b16 %v94
    %v319 = vunpack.c.l.b16 %v95
    %v320 = vunpack.c.l.b16 %v96
    %v321 = vunpack.c.l.b16 %v97
    %v322 = vunpack.c.l.b16 %v98
    %v323 = vunpack.c.l.b16 %v99
    %v324 = vunpack.c.l.b16 %v100
    %v325 = vunpack.c.l.b16 %v101
    %v326 = vunpack.c.l.b16 %v102
    %v327 = vunpack.c.l.b16 %v103
    %v328 = vunpack.c.l.b16 %v104
    %v329 = vunpack.c.l.b16 %v105
    %v330 = vunpack.c.l.b16 %v106
    %v331 = vunpack.c.l.b16 %v107
    %v332 = vunpack.c.l.b16 %v108
    %v333 = vunpack.c.l.b16 %v109
    %v334 = vunpack.c.l.b16 %v110
    %v335 = vunpack.c.l.b16 %v111
    %v336 = vunpack.c.l.b16 %v112
    %v337 = vunpack.c.l.b16 %v113
    %v338 = vunpack.c.l.b16 %v114
    %v339 = vunpack.c.l.b16 %v115
    %v340 = vunpack.c.l.b16 %v116
    %v341 = vunpack.c.l.b16 %v117
    %v342 = vunpack.c.l.b16 %v118
    %v343 = vunpack.c.l.b16 %v119
    %v344 = vunpack.c.l.b16 %v120
    %v345 = vunpack.c.l.b16 %v121
    %v346 = vunpack.c.l.b16 %v122
    %v347 = vunpack.c.l.b16 %v123
    %v348 = vunpack.c.l.b16 %v124
    %v349 = vunpack.c.l.b16 %v125
    %v350 = vpack.c.b16 %v319, %v318
    %v351 = vpack.c.b16 %v321, %v320
    %v352 = vpack.c.b16 %v323, %v322
    %v353 = vpack.c.b16 %v325, %v324
    %v354 = vpack.c.b16 %v327, %v326
    %v355 = vpack.c.b16 %v329, %v328
    %v356 = vpack.c.b16 %v331, %v330
    %v357 = vpack.c.b16 %v333, %v332
    %v358 = vpack.c.b16 %v335, %v334
    %v359 = vpack.c.b16 %v337, %v336
    %v360 = vpack.c.b16 %v339, %v338
    %v361 = vpack.c.b16 %v341, %v340
    %v362 = vpack.c.b16 %v343, %v342
    %v363 = vpack.c.b16 %v345, %v344
    %v364 = vpack.c.b16 %v347, %v346
    %v365 = vpack.c.b16 %v349, %v348
    %382 = vmatpush.bf16.msra.mxu0 %v357
    %383 = vmatpush.bf16.msra.mxu0 %v356
    %384 = vmatpush.bf16.msra.mxu0 %v355
    %385 = vmatpush.bf16.msra.mxu0 %v354
    %386 = vmatpush.bf16.msra.mxu0 %v353
    %387 = vmatpush.bf16.msra.mxu0 %v352
    %388 = vmatpush.bf16.msra.mxu0 %v351
    %389 = vmatpush.bf16.msra.mxu0 %v350
    %390 = vmatmul.bf16.gmra.mxu0 %v222
    %v391 = vpop.f32.mrf.mxu0
    %v392 = vadd.f32 0.0, %v391
    %v393 = vpop.f32.mrf.mxu0
    %v394 = vadd.f32 0.0, %v393
    %395 = vmatmul.bf16.gmra.mxu0 %v224
    %v396 = vpop.f32.mrf.mxu0
    %v397 = vadd.f32 0.0, %v396
    %v398 = vpop.f32.mrf.mxu0
    %v399 = vadd.f32 0.0, %v398
    %400 = vmatmul.bf16.gmra.mxu0 %v226
    %v401 = vpop.f32.mrf.mxu0
    %v402 = vadd.f32 0.0, %v401
    %v403 = vpop.f32.mrf.mxu0
    %v404 = vadd.f32 0.0, %v403
    %405 = vmatmul.bf16.gmra.mxu0 %v228
    %v406 = vpop.f32.mrf.mxu0
    %v407 = vadd.f32 0.0, %v406
    %v408 = vpop.f32.mrf.mxu0
    %v409 = vadd.f32 0.0, %v408
    %410 = vmatmul.bf16.gmra.mxu0 %v230
    %v411 = vpop.f32.mrf.mxu0
    %v412 = vadd.f32 0.0, %v411
    %v413 = vpop.f32.mrf.mxu0
    %v414 = vadd.f32 0.0, %v413
    %415 = vmatmul.bf16.gmra.mxu0 %v232
    %v416 = vpop.f32.mrf.mxu0
    %v417 = vadd.f32 0.0, %v416
    %v418 = vpop.f32.mrf.mxu0
    %v419 = vadd.f32 0.0, %v418
    %420 = vmatmul.bf16.gmra.mxu0 %v234
    %v421 = vpop.f32.mrf.mxu0
    %v422 = vadd.f32 0.0, %v421
    %v423 = vpop.f32.mrf.mxu0
    %v424 = vadd.f32 0.0, %v423
    %425 = vmatmul.bf16.gmra.mxu0 %v236
    %v426 = vpop.f32.mrf.mxu0
    %v427 = vadd.f32 0.0, %v426
    %v428 = vpop.f32.mrf.mxu0
    %v429 = vadd.f32 0.0, %v428
    %430 = vmatmul.bf16.gmra.mxu0 %v238
    %v431 = vpop.f32.mrf.mxu0
    %v432 = vadd.f32 0.0, %v431
    %v433 = vpop.f32.mrf.mxu0
    %v434 = vadd.f32 0.0, %v433
    %435 = vmatmul.bf16.gmra.mxu0 %v240
    %v436 = vpop.f32.mrf.mxu0
    %v437 = vadd.f32 0.0, %v436
    %v438 = vpop.f32.mrf.mxu0
    %v439 = vadd.f32 0.0, %v438
    %440 = vmatmul.bf16.gmra.mxu0 %v242
    %v441 = vpop.f32.mrf.mxu0
    %v442 = vadd.f32 0.0, %v441
    %v443 = vpop.f32.mrf.mxu0
    %v444 = vadd.f32 0.0, %v443
    %445 = vmatmul.bf16.gmra.mxu0 %v244
    %v446 = vpop.f32.mrf.mxu0
    %v447 = vadd.f32 0.0, %v446
    %v448 = vpop.f32.mrf.mxu0
    %v449 = vadd.f32 0.0, %v448
    %450 = vmatmul.bf16.gmra.mxu0 %v246
    %v451 = vpop.f32.mrf.mxu0
    %v452 = vadd.f32 0.0, %v451
    %v453 = vpop.f32.mrf.mxu0
    %v454 = vadd.f32 0.0, %v453
    %455 = vmatmul.bf16.gmra.mxu0 %v248
    %v456 = vpop.f32.mrf.mxu0
    %v457 = vadd.f32 0.0, %v456
    %v458 = vpop.f32.mrf.mxu0
    %v459 = vadd.f32 0.0, %v458
    %460 = vmatmul.bf16.gmra.mxu0 %v250
    %v461 = vpop.f32.mrf.mxu0
    %v462 = vadd.f32 0.0, %v461
    %v463 = vpop.f32.mrf.mxu0
    %v464 = vadd.f32 0.0, %v463
    %465 = vmatmul.bf16.gmra.mxu0 %v252
    %v466 = vpop.f32.mrf.mxu0
    %v467 = vadd.f32 0.0, %v466
    %v468 = vpop.f32.mrf.mxu0
    %v469 = vadd.f32 0.0, %v468
    %470 = vdwg.mxu0
    %471 = vmatpush.bf16.msra.mxu0 %v365
    %472 = vmatpush.bf16.msra.mxu0 %v364
    %473 = vmatpush.bf16.msra.mxu0 %v363
    %474 = vmatpush.bf16.msra.mxu0 %v362
    %475 = vmatpush.bf16.msra.mxu0 %v361
    %476 = vmatpush.bf16.msra.mxu0 %v360
    %477 = vmatpush.bf16.msra.mxu0 %v359
    %478 = vmatpush.bf16.msra.mxu0 %v358
    %479 = vmatmul.bf16.gmra.mxu0 %v223
    %v480 = vpop.f32.mrf.mxu0
    %v481 = vadd.f32 %v392, %v480
    %v482 = vpop.f32.mrf.mxu0
    %v483 = vadd.f32 %v394, %v482
    %484 = vmatmul.bf16.gmra.mxu0 %v225
    %v485 = vpop.f32.mrf.mxu0
    %v486 = vadd.f32 %v397, %v485
    %v487 = vpop.f32.mrf.mxu0
    %v488 = vadd.f32 %v399, %v487
    %489 = vmatmul.bf16.gmra.mxu0 %v227
    %v490 = vpop.f32.mrf.mxu0
    %v491 = vadd.f32 %v402, %v490
    %v492 = vpop.f32.mrf.mxu0
    %v493 = vadd.f32 %v404, %v492
    %494 = vmatmul.bf16.gmra.mxu0 %v229
    %v495 = vpop.f32.mrf.mxu0
    %v496 = vadd.f32 %v407, %v495
    %v497 = vpop.f32.mrf.mxu0
    %v498 = vadd.f32 %v409, %v497
    %499 = vmatmul.bf16.gmra.mxu0 %v231
    %v500 = vpop.f32.mrf.mxu0
    %v501 = vadd.f32 %v412, %v500
    %v502 = vpop.f32.mrf.mxu0
    %v503 = vadd.f32 %v414, %v502
    %504 = vmatmul.bf16.gmra.mxu0 %v233
    %v505 = vpop.f32.mrf.mxu0
    %v506 = vadd.f32 %v417, %v505
    %v507 = vpop.f32.mrf.mxu0
    %v508 = vadd.f32 %v419, %v507
    %509 = vmatmul.bf16.gmra.mxu0 %v235
    %v510 = vpop.f32.mrf.mxu0
    %v511 = vadd.f32 %v422, %v510
    %v512 = vpop.f32.mrf.mxu0
    %v513 = vadd.f32 %v424, %v512
    %514 = vmatmul.bf16.gmra.mxu0 %v237
    %v515 = vpop.f32.mrf.mxu0
    %v516 = vadd.f32 %v427, %v515
    %v517 = vpop.f32.mrf.mxu0
    %v518 = vadd.f32 %v429, %v517
    %519 = vmatmul.bf16.gmra.mxu0 %v239
    %v520 = vpop.f32.mrf.mxu0
    %v521 = vadd.f32 %v432, %v520
    %v522 = vpop.f32.mrf.mxu0
    %v523 = vadd.f32 %v434, %v522
    %524 = vmatmul.bf16.gmra.mxu0 %v241
    %v525 = vpop.f32.mrf.mxu0
    %v526 = vadd.f32 %v437, %v525
    %v527 = vpop.f32.mrf.mxu0
    %v528 = vadd.f32 %v439, %v527
    %529 = vmatmul.bf16.gmra.mxu0 %v243
    %v530 = vpop.f32.mrf.mxu0
    %v531 = vadd.f32 %v442, %v530
    %v532 = vpop.f32.mrf.mxu0
    %v533 = vadd.f32 %v444, %v532
    %534 = vmatmul.bf16.gmra.mxu0 %v245
    %v535 = vpop.f32.mrf.mxu0
    %v536 = vadd.f32 %v447, %v535
    %v537 = vpop.f32.mrf.mxu0
    %v538 = vadd.f32 %v449, %v537
    %539 = vmatmul.bf16.gmra.mxu0 %v247
    %v540 = vpop.f32.mrf.mxu0
    %v541 = vadd.f32 %v452, %v540
    %v542 = vpop.f32.mrf.mxu0
    %v543 = vadd.f32 %v454, %v542
    %544 = vmatmul.bf16.gmra.mxu0 %v249
    %v545 = vpop.f32.mrf.mxu0
    %v546 = vadd.f32 %v457, %v545
    %v547 = vpop.f32.mrf.mxu0
    %v548 = vadd.f32 %v459, %v547
    %549 = vmatmul.bf16.gmra.mxu0 %v251
    %v550 = vpop.f32.mrf.mxu0
    %v551 = vadd.f32 %v462, %v550
    %v552 = vpop.f32.mrf.mxu0
    %v553 = vadd.f32 %v464, %v552
    %554 = vmatmul.bf16.gmra.mxu0 %v253
    %v555 = vpop.f32.mrf.mxu0
    %v556 = vadd.f32 %v467, %v555
    %v557 = vpop.f32.mrf.mxu0
    %v558 = vadd.f32 %v469, %v557
    %559 = vdwg.mxu0
    %v560 = vmul.f32 %v481, %v481
    %v561 = vmul.f32 %v483, %v483
    %v562 = vmul.f32 %v486, %v486
    %v563 = vmul.f32 %v488, %v488
    %v564 = vmul.f32 %v491, %v491
    %v565 = vmul.f32 %v493, %v493
    %v566 = vmul.f32 %v496, %v496
    %v567 = vmul.f32 %v498, %v498
    %v568 = vmul.f32 %v501, %v501
    %v569 = vmul.f32 %v503, %v503
    %v570 = vmul.f32 %v506, %v506
    %v571 = vmul.f32 %v508, %v508
    %v572 = vmul.f32 %v511, %v511
    %v573 = vmul.f32 %v513, %v513
    %v574 = vmul.f32 %v516, %v516
    %v575 = vmul.f32 %v518, %v518
    %v576 = vmul.f32 %v521, %v521
    %v577 = vmul.f32 %v523, %v523
    %v578 = vmul.f32 %v526, %v526
    %v579 = vmul.f32 %v528, %v528
    %v580 = vmul.f32 %v531, %v531
    %v581 = vmul.f32 %v533, %v533
    %v582 = vmul.f32 %v536, %v536
    %v583 = vmul.f32 %v538, %v538
    %v584 = vmul.f32 %v541, %v541
    %v585 = vmul.f32 %v543, %v543
    %v586 = vmul.f32 %v546, %v546
    %v587 = vmul.f32 %v548, %v548
    %v588 = vmul.f32 %v551, %v551
    %v589 = vmul.f32 %v553, %v553
    %v590 = vmul.f32 %v556, %v556
    %v591 = vmul.f32 %v558, %v558
    %v592 = vadd.f32 %v560, %v576
    %v593 = vadd.f32 %v561, %v577
    %v594 = vadd.f32 %v562, %v578
    %v595 = vadd.f32 %v563, %v579
    %v596 = vadd.f32 %v564, %v580
    %v597 = vadd.f32 %v565, %v581
    %v598 = vadd.f32 %v566, %v582
    %v599 = vadd.f32 %v567, %v583
    %v600 = vadd.f32 %v568, %v584
    %v601 = vadd.f32 %v569, %v585
    %v602 = vadd.f32 %v570, %v586
    %v603 = vadd.f32 %v571, %v587
    %v604 = vadd.f32 %v572, %v588
    %v605 = vadd.f32 %v573, %v589
    %v606 = vadd.f32 %v574, %v590
    %v607 = vadd.f32 %v575, %v591
    %v608 = vld [vmem:[#allocation7] sm:$0xff]
    %v609 = vld [vmem:[#allocation7 + $0x8] sm:$0xff]
    %v610 = vld [vmem:[#allocation7 + $0x10] sm:$0xff]
    %v611 = vld [vmem:[#allocation7 + $0x18] sm:$0xff]
    %v612 = vld [vmem:[#allocation7 + $0x20] sm:$0xff]
    %v613 = vld [vmem:[#allocation7 + $0x28] sm:$0xff]
    %v614 = vld [vmem:[#allocation7 + $0x30] sm:$0xff]
    %v615 = vld [vmem:[#allocation7 + $0x38] sm:$0xff]
    %v616 = vld [vmem:[#allocation7 + $0x40] sm:$0xff]
    %v617 = vld [vmem:[#allocation7 + $0x48] sm:$0xff]
    %v618 = vld [vmem:[#allocation7 + $0x50] sm:$0xff]
    %v619 = vld [vmem:[#allocation7 + $0x58] sm:$0xff]
    %v620 = vld [vmem:[#allocation7 + $0x60] sm:$0xff]
    %v621 = vld [vmem:[#allocation7 + $0x68] sm:$0xff]
    %v622 = vld [vmem:[#allocation7 + $0x70] sm:$0xff]
    %v623 = vld [vmem:[#allocation7 + $0x78] sm:$0xff]
    %v624 = vand.u32 %v607, 4294901760
    %625 = vmatpush.msra.mxu0 %v624
    %v626 = vand.u32 %v606, 4294901760
    %627 = vmatpush.msra.mxu0 %v626
    %v628 = vand.u32 %v605, 4294901760
    %629 = vmatpush.msra.mxu0 %v628
    %v630 = vand.u32 %v604, 4294901760
    %631 = vmatpush.msra.mxu0 %v630
    %v632 = vand.u32 %v603, 4294901760
    %633 = vmatpush.msra.mxu0 %v632
    %v634 = vand.u32 %v602, 4294901760
    %635 = vmatpush.msra.mxu0 %v634
    %v636 = vand.u32 %v601, 4294901760
    %637 = vmatpush.msra.mxu0 %v636
    %v638 = vand.u32 %v600, 4294901760
    %639 = vmatpush.msra.mxu0 %v638
    %v640 = vand.u32 %v599, 4294901760
    %641 = vmatpush.msra.mxu0 %v640
    %v642 = vand.u32 %v598, 4294901760
    %643 = vmatpush.msra.mxu0 %v642
    %v644 = vand.u32 %v597, 4294901760
    %645 = vmatpush.msra.mxu0 %v644
    %v646 = vand.u32 %v596, 4294901760
    %647 = vmatpush.msra.mxu0 %v646
    %v648 = vand.u32 %v595, 4294901760
    %649 = vmatpush.msra.mxu0 %v648
    %v650 = vand.u32 %v594, 4294901760
    %651 = vmatpush.msra.mxu0 %v650
    %v652 = vand.u32 %v593, 4294901760
    %653 = vmatpush.msra.mxu0 %v652
    %v654 = vand.u32 %v592, 4294901760
    %655 = vmatpush.msra.mxu0 %v654
    %v656 = vand.u32 %v608, 4294901760
    %v657 = vsub.f32 %v608, %v656
    %v658 = vand.u32 %v657, 4294901760
    %v659 = vsub.f32 %v657, %v658
    %v660 = vand.u32 %v659, 4294901760
    %661 = vmatmul.f32.gmra.mxu0 %v660
    %v662 = vpop.f32.mrf.mxu0
    %v663 = vadd.f32 1e-06, %v662
    %v664 = vand.u32 %v609, 4294901760
    %v665 = vsub.f32 %v609, %v664
    %v666 = vand.u32 %v665, 4294901760
    %v667 = vsub.f32 %v665, %v666
    %v668 = vand.u32 %v667, 4294901760
    %669 = vmatmul.f32.gmra.mxu0 %v668
    %v670 = vpop.f32.mrf.mxu0
    %v671 = vadd.f32 1e-06, %v670
    %v672 = vand.u32 %v610, 4294901760
    %v673 = vsub.f32 %v610, %v672
    %v674 = vand.u32 %v673, 4294901760
    %v675 = vsub.f32 %v673, %v674
    %v676 = vand.u32 %v675, 4294901760
    %677 = vmatmul.f32.gmra.mxu0 %v676
    %v678 = vpop.f32.mrf.mxu0
    %v679 = vadd.f32 1e-06, %v678
    %v680 = vand.u32 %v611, 4294901760
    %v681 = vsub.f32 %v611, %v680
    %v682 = vand.u32 %v681, 4294901760
    %v683 = vsub.f32 %v681, %v682
    %v684 = vand.u32 %v683, 4294901760
    %685 = vmatmul.f32.gmra.mxu0 %v684
    %v686 = vpop.f32.mrf.mxu0
    %v687 = vadd.f32 1e-06, %v686
    %v688 = vand.u32 %v612, 4294901760
    %v689 = vsub.f32 %v612, %v688
    %v690 = vand.u32 %v689, 4294901760
    %v691 = vsub.f32 %v689, %v690
    %v692 = vand.u32 %v691, 4294901760
    %693 = vmatmul.f32.gmra.mxu0 %v692
    %v694 = vpop.f32.mrf.mxu0
    %v695 = vadd.f32 1e-06, %v694
    %v696 = vand.u32 %v613, 4294901760
    %v697 = vsub.f32 %v613, %v696
    %v698 = vand.u32 %v697, 4294901760
    %v699 = vsub.f32 %v697, %v698
    %v700 = vand.u32 %v699, 4294901760
    %701 = vmatmul.f32.gmra.mxu0 %v700
    %v702 = vpop.f32.mrf.mxu0
    %v703 = vadd.f32 1e-06, %v702
    %v704 = vand.u32 %v614, 4294901760
    %v705 = vsub.f32 %v614, %v704
    %v706 = vand.u32 %v705, 4294901760
    %v707 = vsub.f32 %v705, %v706
    %v708 = vand.u32 %v707, 4294901760
    %709 = vmatmul.f32.gmra.mxu0 %v708
    %v710 = vpop.f32.mrf.mxu0
    %v711 = vadd.f32 1e-06, %v710
    %v712 = vand.u32 %v615, 4294901760
    %v713 = vsub.f32 %v615, %v712
    %v714 = vand.u32 %v713, 4294901760
    %v715 = vsub.f32 %v713, %v714
    %v716 = vand.u32 %v715, 4294901760
    %717 = vmatmul.f32.gmra.mxu0 %v716
    %v718 = vpop.f32.mrf.mxu0
    %v719 = vadd.f32 1e-06, %v718
    %v720 = vand.u32 %v616, 4294901760
    %v721 = vsub.f32 %v616, %v720
    %v722 = vand.u32 %v721, 4294901760
    %v723 = vsub.f32 %v721, %v722
    %v724 = vand.u32 %v723, 4294901760
    %725 = vmatmul.f32.gmra.mxu0 %v724
    %v726 = vpop.f32.mrf.mxu0
    %v727 = vadd.f32 1e-06, %v726
    %v728 = vand.u32 %v617, 4294901760
    %v729 = vsub.f32 %v617, %v728
    %v730 = vand.u32 %v729, 4294901760
    %v731 = vsub.f32 %v729, %v730
    %v732 = vand.u32 %v731, 4294901760
    %733 = vmatmul.f32.gmra.mxu0 %v732
    %v734 = vpop.f32.mrf.mxu0
    %v735 = vadd.f32 1e-06, %v734
    %v736 = vand.u32 %v618, 4294901760
    %v737 = vsub.f32 %v618, %v736
    %v738 = vand.u32 %v737, 4294901760
    %v739 = vsub.f32 %v737, %v738
    %v740 = vand.u32 %v739, 4294901760
    %741 = vmatmul.f32.gmra.mxu0 %v740
    %v742 = vpop.f32.mrf.mxu0
    %v743 = vadd.f32 1e-06, %v742
    %v744 = vand.u32 %v619, 4294901760
    %v745 = vsub.f32 %v619, %v744
    %v746 = vand.u32 %v745, 4294901760
    %v747 = vsub.f32 %v745, %v746
    %v748 = vand.u32 %v747, 4294901760
    %749 = vmatmul.f32.gmra.mxu0 %v748
    %v750 = vpop.f32.mrf.mxu0
    %v751 = vadd.f32 1e-06, %v750
    %v752 = vand.u32 %v620, 4294901760
    %v753 = vsub.f32 %v620, %v752
    %v754 = vand.u32 %v753, 4294901760
    %v755 = vsub.f32 %v753, %v754
    %v756 = vand.u32 %v755, 4294901760
    %757 = vmatmul.f32.gmra.mxu0 %v756
    %v758 = vpop.f32.mrf.mxu0
    %v759 = vadd.f32 1e-06, %v758
    %v760 = vand.u32 %v621, 4294901760
    %v761 = vsub.f32 %v621, %v760
    %v762 = vand.u32 %v761, 4294901760
    %v763 = vsub.f32 %v761, %v762
    %v764 = vand.u32 %v763, 4294901760
    %765 = vmatmul.f32.gmra.mxu0 %v764
    %v766 = vpop.f32.mrf.mxu0
    %v767 = vadd.f32 1e-06, %v766
    %v768 = vand.u32 %v622, 4294901760
    %v769 = vsub.f32 %v622, %v768
    %v770 = vand.u32 %v769, 4294901760
    %v771 = vsub.f32 %v769, %v770
    %v772 = vand.u32 %v771, 4294901760
    %773 = vmatmul.f32.gmra.mxu0 %v772
    %v774 = vpop.f32.mrf.mxu0
    %v775 = vadd.f32 1e-06, %v774
    %v776 = vand.u32 %v623, 4294901760
    %v777 = vsub.f32 %v623, %v776
    %v778 = vand.u32 %v777, 4294901760
    %v779 = vsub.f32 %v777, %v778
    %v780 = vand.u32 %v779, 4294901760
    %781 = vmatmul.f32.gmra.mxu0 %v780
    %v782 = vpop.f32.mrf.mxu0
    %v783 = vadd.f32 1e-06, %v782
    %784 = vdwg.mxu0
    %v785 = vand.u32 %v607, 4294901760
    %v786 = vsub.f32 %v607, %v785
    %v787 = vand.u32 %v786, 4294901760
    %v788 = vsub.f32 %v786, %v787
    %v789 = vand.u32 %v788, 4294901760
    %790 = vmatpush.msra.mxu0 %v789
    %v791 = vand.u32 %v606, 4294901760
    %v792 = vsub.f32 %v606, %v791
    %v793 = vand.u32 %v792, 4294901760
    %v794 = vsub.f32 %v792, %v793
    %v795 = vand.u32 %v794, 4294901760
    %796 = vmatpush.msra.mxu0 %v795
    %v797 = vand.u32 %v605, 4294901760
    %v798 = vsub.f32 %v605, %v797
    %v799 = vand.u32 %v798, 4294901760
    %v800 = vsub.f32 %v798, %v799
    %v801 = vand.u32 %v800, 4294901760
    %802 = vmatpush.msra.mxu0 %v801
    %v803 = vand.u32 %v604, 4294901760
    %v804 = vsub.f32 %v604, %v803
    %v805 = vand.u32 %v804, 4294901760
    %v806 = vsub.f32 %v804, %v805
    %v807 = vand.u32 %v806, 4294901760
    %808 = vmatpush.msra.mxu0 %v807
    %v809 = vand.u32 %v603, 4294901760
    %v810 = vsub.f32 %v603, %v809
    %v811 = vand.u32 %v810, 4294901760
    %v812 = vsub.f32 %v810, %v811
    %v813 = vand.u32 %v812, 4294901760
    %814 = vmatpush.msra.mxu0 %v813
    %v815 = vand.u32 %v602, 4294901760
    %v816 = vsub.f32 %v602, %v815
    %v817 = vand.u32 %v816, 4294901760
    %v818 = vsub.f32 %v816, %v817
    %v819 = vand.u32 %v818, 4294901760
    %820 = vmatpush.msra.mxu0 %v819
    %v821 = vand.u32 %v601, 4294901760
    %v822 = vsub.f32 %v601, %v821
    %v823 = vand.u32 %v822, 4294901760
    %v824 = vsub.f32 %v822, %v823
    %v825 = vand.u32 %v824, 4294901760
    %826 = vmatpush.msra.mxu0 %v825
    %v827 = vand.u32 %v600, 4294901760
    %v828 = vsub.f32 %v600, %v827
    %v829 = vand.u32 %v828, 4294901760
    %v830 = vsub.f32 %v828, %v829
    %v831 = vand.u32 %v830, 4294901760
    %832 = vmatpush.msra.mxu0 %v831
    %v833 = vand.u32 %v599, 4294901760
    %v834 = vsub.f32 %v599, %v833
    %v835 = vand.u32 %v834, 4294901760
    %v836 = vsub.f32 %v834, %v835
    %v837 = vand.u32 %v836, 4294901760
    %838 = vmatpush.msra.mxu0 %v837
    %v839 = vand.u32 %v598, 4294901760
    %v840 = vsub.f32 %v598, %v839
    %v841 = vand.u32 %v840, 4294901760
    %v842 = vsub.f32 %v840, %v841
    %v843 = vand.u32 %v842, 4294901760
    %844 = vmatpush.msra.mxu0 %v843
    %v845 = vand.u32 %v597, 4294901760
    %v846 = vsub.f32 %v597, %v845
    %v847 = vand.u32 %v846, 4294901760
    %v848 = vsub.f32 %v846, %v847
    %v849 = vand.u32 %v848, 4294901760
    %850 = vmatpush.msra.mxu0 %v849
    %v851 = vand.u32 %v596, 4294901760
    %v852 = vsub.f32 %v596, %v851
    %v853 = vand.u32 %v852, 4294901760
    %v854 = vsub.f32 %v852, %v853
    %v855 = vand.u32 %v854, 4294901760
    %856 = vmatpush.msra.mxu0 %v855
    %v857 = vand.u32 %v595, 4294901760
    %v858 = vsub.f32 %v595, %v857
    %v859 = vand.u32 %v858, 4294901760
    %v860 = vsub.f32 %v858, %v859
    %v861 = vand.u32 %v860, 4294901760
    %862 = vmatpush.msra.mxu0 %v861
    %v863 = vand.u32 %v594, 4294901760
    %v864 = vsub.f32 %v594, %v863
    %v865 = vand.u32 %v864, 4294901760
    %v866 = vsub.f32 %v864, %v865
    %v867 = vand.u32 %v866, 4294901760
    %868 = vmatpush.msra.mxu0 %v867
    %v869 = vand.u32 %v593, 4294901760
    %v870 = vsub.f32 %v593, %v869
    %v871 = vand.u32 %v870, 4294901760
    %v872 = vsub.f32 %v870, %v871
    %v873 = vand.u32 %v872, 4294901760
    %874 = vmatpush.msra.mxu0 %v873
    %v875 = vand.u32 %v592, 4294901760
    %v876 = vsub.f32 %v592, %v875
    %v877 = vand.u32 %v876, 4294901760
    %v878 = vsub.f32 %v876, %v877
    %v879 = vand.u32 %v878, 4294901760
    %880 = vmatpush.msra.mxu0 %v879
    %v881 = vand.u32 %v608, 4294901760
    %882 = vmatmul.f32.gmra.mxu0 %v881
    %v883 = vpop.f32.mrf.mxu0
    %v884 = vadd.f32 %v663, %v883
    %v885 = vand.u32 %v609, 4294901760
    %886 = vmatmul.f32.gmra.mxu0 %v885
    %v887 = vpop.f32.mrf.mxu0
    %v888 = vadd.f32 %v671, %v887
    %v889 = vand.u32 %v610, 4294901760
    %890 = vmatmul.f32.gmra.mxu0 %v889
    %v891 = vpop.f32.mrf.mxu0
    %v892 = vadd.f32 %v679, %v891
    %v893 = vand.u32 %v611, 4294901760
    %894 = vmatmul.f32.gmra.mxu0 %v893
    %v895 = vpop.f32.mrf.mxu0
    %v896 = vadd.f32 %v687, %v895
    %v897 = vand.u32 %v612, 4294901760
    %898 = vmatmul.f32.gmra.mxu0 %v897
    %v899 = vpop.f32.mrf.mxu0
    %v900 = vadd.f32 %v695, %v899
    %v901 = vand.u32 %v613, 4294901760
    %902 = vmatmul.f32.gmra.mxu0 %v901
    %v903 = vpop.f32.mrf.mxu0
    %v904 = vadd.f32 %v703, %v903
    %v905 = vand.u32 %v614, 4294901760
    %906 = vmatmul.f32.gmra.mxu0 %v905
    %v907 = vpop.f32.mrf.mxu0
    %v908 = vadd.f32 %v711, %v907
    %v909 = vand.u32 %v615, 4294901760
    %910 = vmatmul.f32.gmra.mxu0 %v909
    %v911 = vpop.f32.mrf.mxu0
    %v912 = vadd.f32 %v719, %v911
    %v913 = vand.u32 %v616, 4294901760
    %914 = vmatmul.f32.gmra.mxu0 %v913
    %v915 = vpop.f32.mrf.mxu0
    %v916 = vadd.f32 %v727, %v915
    %v917 = vand.u32 %v617, 4294901760
    %918 = vmatmul.f32.gmra.mxu0 %v917
    %v919 = vpop.f32.mrf.mxu0
    %v920 = vadd.f32 %v735, %v919
    %v921 = vand.u32 %v618, 4294901760
    %922 = vmatmul.f32.gmra.mxu0 %v921
    %v923 = vpop.f32.mrf.mxu0
    %v924 = vadd.f32 %v743, %v923
    %v925 = vand.u32 %v619, 4294901760
    %926 = vmatmul.f32.gmra.mxu0 %v925
    %v927 = vpop.f32.mrf.mxu0
    %v928 = vadd.f32 %v751, %v927
    %v929 = vand.u32 %v620, 4294901760
    %930 = vmatmul.f32.gmra.mxu0 %v929
    %v931 = vpop.f32.mrf.mxu0
    %v932 = vadd.f32 %v759, %v931
    %v933 = vand.u32 %v621, 4294901760
    %934 = vmatmul.f32.gmra.mxu0 %v933
    %v935 = vpop.f32.mrf.mxu0
    %v936 = vadd.f32 %v767, %v935
    %v937 = vand.u32 %v622, 4294901760
    %938 = vmatmul.f32.gmra.mxu0 %v937
    %v939 = vpop.f32.mrf.mxu0
    %v940 = vadd.f32 %v775, %v939
    %v941 = vand.u32 %v623, 4294901760
    %942 = vmatmul.f32.gmra.mxu0 %v941
    %v943 = vpop.f32.mrf.mxu0
    %v944 = vadd.f32 %v783, %v943
    %945 = vdwg.mxu0
    %v946 = vand.u32 %v607, 4294901760
    %v947 = vsub.f32 %v607, %v946
    %948 = vmatpush.msra.mxu0 %v947
    %v949 = vand.u32 %v606, 4294901760
    %v950 = vsub.f32 %v606, %v949
    %951 = vmatpush.msra.mxu0 %v950
    %v952 = vand.u32 %v605, 4294901760
    %v953 = vsub.f32 %v605, %v952
    %954 = vmatpush.msra.mxu0 %v953
    %v955 = vand.u32 %v604, 4294901760
    %v956 = vsub.f32 %v604, %v955
    %957 = vmatpush.msra.mxu0 %v956
    %v958 = vand.u32 %v603, 4294901760
    %v959 = vsub.f32 %v603, %v958
    %960 = vmatpush.msra.mxu0 %v959
    %v961 = vand.u32 %v602, 4294901760
    %v962 = vsub.f32 %v602, %v961
    %963 = vmatpush.msra.mxu0 %v962
    %v964 = vand.u32 %v601, 4294901760
    %v965 = vsub.f32 %v601, %v964
    %966 = vmatpush.msra.mxu0 %v965
    %v967 = vand.u32 %v600, 4294901760
    %v968 = vsub.f32 %v600, %v967
    %969 = vmatpush.msra.mxu0 %v968
    %v970 = vand.u32 %v599, 4294901760
    %v971 = vsub.f32 %v599, %v970
    %972 = vmatpush.msra.mxu0 %v971
    %v973 = vand.u32 %v598, 4294901760
    %v974 = vsub.f32 %v598, %v973
    %975 = vmatpush.msra.mxu0 %v974
    %v976 = vand.u32 %v597, 4294901760
    %v977 = vsub.f32 %v597, %v976
    %978 = vmatpush.msra.mxu0 %v977
    %v979 = vand.u32 %v596, 4294901760
    %v980 = vsub.f32 %v596, %v979
    %981 = vmatpush.msra.mxu0 %v980
    %v982 = vand.u32 %v595, 4294901760
    %v983 = vsub.f32 %v595, %v982
    %984 = vmatpush.msra.mxu0 %v983
    %v985 = vand.u32 %v594, 4294901760
    %v986 = vsub.f32 %v594, %v985
    %987 = vmatpush.msra.mxu0 %v986
    %v988 = vand.u32 %v593, 4294901760
    %v989 = vsub.f32 %v593, %v988
    %990 = vmatpush.msra.mxu0 %v989
    %v991 = vand.u32 %v592, 4294901760
    %v992 = vsub.f32 %v592, %v991
    %993 = vmatpush.msra.mxu0 %v992
    %v994 = vand.u32 %v608, 4294901760
    %v995 = vsub.f32 %v608, %v994
    %996 = vmatmul.f32.gmra.mxu0 %v995
    %v997 = vpop.f32.mrf.mxu0
    %v998 = vadd.f32 %v884, %v997
    %v999 = vand.u32 %v609, 4294901760
    %v1000 = vsub.f32 %v609, %v999
    %1001 = vmatmul.f32.gmra.mxu0 %v1000
    %v1002 = vpop.f32.mrf.mxu0
    %v1003 = vadd.f32 %v888, %v1002
    %v1004 = vand.u32 %v610, 4294901760
    %v1005 = vsub.f32 %v610, %v1004
    %1006 = vmatmul.f32.gmra.mxu0 %v1005
    %v1007 = vpop.f32.mrf.mxu0
    %v1008 = vadd.f32 %v892, %v1007
    %v1009 = vand.u32 %v611, 4294901760
    %v1010 = vsub.f32 %v611, %v1009
    %1011 = vmatmul.f32.gmra.mxu0 %v1010
    %v1012 = vpop.f32.mrf.mxu0
    %v1013 = vadd.f32 %v896, %v1012
    %v1014 = vand.u32 %v612, 4294901760
    %v1015 = vsub.f32 %v612, %v1014
    %1016 = vmatmul.f32.gmra.mxu0 %v1015
    %v1017 = vpop.f32.mrf.mxu0
    %v1018 = vadd.f32 %v900, %v1017
    %v1019 = vand.u32 %v613, 4294901760
    %v1020 = vsub.f32 %v613, %v1019
    %1021 = vmatmul.f32.gmra.mxu0 %v1020
    %v1022 = vpop.f32.mrf.mxu0
    %v1023 = vadd.f32 %v904, %v1022
    %v1024 = vand.u32 %v614, 4294901760
    %v1025 = vsub.f32 %v614, %v1024
    %1026 = vmatmul.f32.gmra.mxu0 %v1025
    %v1027 = vpop.f32.mrf.mxu0
    %v1028 = vadd.f32 %v908, %v1027
    %v1029 = vand.u32 %v615, 4294901760
    %v1030 = vsub.f32 %v615, %v1029
    %1031 = vmatmul.f32.gmra.mxu0 %v1030
    %v1032 = vpop.f32.mrf.mxu0
    %v1033 = vadd.f32 %v912, %v1032
    %v1034 = vand.u32 %v616, 4294901760
    %v1035 = vsub.f32 %v616, %v1034
    %1036 = vmatmul.f32.gmra.mxu0 %v1035
    %v1037 = vpop.f32.mrf.mxu0
    %v1038 = vadd.f32 %v916, %v1037
    %v1039 = vand.u32 %v617, 4294901760
    %v1040 = vsub.f32 %v617, %v1039
    %1041 = vmatmul.f32.gmra.mxu0 %v1040
    %v1042 = vpop.f32.mrf.mxu0
    %v1043 = vadd.f32 %v920, %v1042
    %v1044 = vand.u32 %v618, 4294901760
    %v1045 = vsub.f32 %v618, %v1044
    %1046 = vmatmul.f32.gmra.mxu0 %v1045
    %v1047 = vpop.f32.mrf.mxu0
    %v1048 = vadd.f32 %v924, %v1047
    %v1049 = vand.u32 %v619, 4294901760
    %v1050 = vsub.f32 %v619, %v1049
    %1051 = vmatmul.f32.gmra.mxu0 %v1050
    %v1052 = vpop.f32.mrf.mxu0
    %v1053 = vadd.f32 %v928, %v1052
    %v1054 = vand.u32 %v620, 4294901760
    %v1055 = vsub.f32 %v620, %v1054
    %1056 = vmatmul.f32.gmra.mxu0 %v1055
    %v1057 = vpop.f32.mrf.mxu0
    %v1058 = vadd.f32 %v932, %v1057
    %v1059 = vand.u32 %v621, 4294901760
    %v1060 = vsub.f32 %v621, %v1059
    %1061 = vmatmul.f32.gmra.mxu0 %v1060
    %v1062 = vpop.f32.mrf.mxu0
    %v1063 = vadd.f32 %v936, %v1062
    %v1064 = vand.u32 %v622, 4294901760
    %v1065 = vsub.f32 %v622, %v1064
    %1066 = vmatmul.f32.gmra.mxu0 %v1065
    %v1067 = vpop.f32.mrf.mxu0
    %v1068 = vadd.f32 %v940, %v1067
    %v1069 = vand.u32 %v623, 4294901760
    %v1070 = vsub.f32 %v623, %v1069
    %1071 = vmatmul.f32.gmra.mxu0 %v1070
    %v1072 = vpop.f32.mrf.mxu0
    %v1073 = vadd.f32 %v944, %v1072
    %1074 = vdwg.mxu0
    %v1075 = vand.u32 %v607, 4294901760
    %1076 = vmatpush.msra.mxu0 %v1075
    %v1077 = vand.u32 %v606, 4294901760
    %1078 = vmatpush.msra.mxu0 %v1077
    %v1079 = vand.u32 %v605, 4294901760
    %1080 = vmatpush.msra.mxu0 %v1079
    %v1081 = vand.u32 %v604, 4294901760
    %1082 = vmatpush.msra.mxu0 %v1081
    %v1083 = vand.u32 %v603, 4294901760
    %1084 = vmatpush.msra.mxu0 %v1083
    %v1085 = vand.u32 %v602, 4294901760
    %1086 = vmatpush.msra.mxu0 %v1085
    %v1087 = vand.u32 %v601, 4294901760
    %1088 = vmatpush.msra.mxu0 %v1087
    %v1089 = vand.u32 %v600, 4294901760
    %1090 = vmatpush.msra.mxu0 %v1089
    %v1091 = vand.u32 %v599, 4294901760
    %1092 = vmatpush.msra.mxu0 %v1091
    %v1093 = vand.u32 %v598, 4294901760
    %1094 = vmatpush.msra.mxu0 %v1093
    %v1095 = vand.u32 %v597, 4294901760
    %1096 = vmatpush.msra.mxu0 %v1095
    %v1097 = vand.u32 %v596, 4294901760
    %1098 = vmatpush.msra.mxu0 %v1097
    %v1099 = vand.u32 %v595, 4294901760
    %1100 = vmatpush.msra.mxu0 %v1099
    %v1101 = vand.u32 %v594, 4294901760
    %1102 = vmatpush.msra.mxu0 %v1101
    %v1103 = vand.u32 %v593, 4294901760
    %1104 = vmatpush.msra.mxu0 %v1103
    %v1105 = vand.u32 %v592, 4294901760
    %1106 = vmatpush.msra.mxu0 %v1105
    %v1107 = vand.u32 %v608, 4294901760
    %v1108 = vsub.f32 %v608, %v1107
    %v1109 = vand.u32 %v1108, 4294901760
    %1110 = vmatmul.f32.gmra.mxu0 %v1109
    %v1111 = vpop.f32.mrf.mxu0
    %v1112 = vadd.f32 %v998, %v1111
    %v1113 = vand.u32 %v609, 4294901760
    %v1114 = vsub.f32 %v609, %v1113
    %v1115 = vand.u32 %v1114, 4294901760
    %1116 = vmatmul.f32.gmra.mxu0 %v1115
    %v1117 = vpop.f32.mrf.mxu0
    %v1118 = vadd.f32 %v1003, %v1117
    %v1119 = vand.u32 %v610, 4294901760
    %v1120 = vsub.f32 %v610, %v1119
    %v1121 = vand.u32 %v1120, 4294901760
    %1122 = vmatmul.f32.gmra.mxu0 %v1121
    %v1123 = vpop.f32.mrf.mxu0
    %v1124 = vadd.f32 %v1008, %v1123
    %v1125 = vand.u32 %v611, 4294901760
    %v1126 = vsub.f32 %v611, %v1125
    %v1127 = vand.u32 %v1126, 4294901760
    %1128 = vmatmul.f32.gmra.mxu0 %v1127
    %v1129 = vpop.f32.mrf.mxu0
    %v1130 = vadd.f32 %v1013, %v1129
    %v1131 = vand.u32 %v612, 4294901760
    %v1132 = vsub.f32 %v612, %v1131
    %v1133 = vand.u32 %v1132, 4294901760
    %1134 = vmatmul.f32.gmra.mxu0 %v1133
    %v1135 = vpop.f32.mrf.mxu0
    %v1136 = vadd.f32 %v1018, %v1135
    %v1137 = vand.u32 %v613, 4294901760
    %v1138 = vsub.f32 %v613, %v1137
    %v1139 = vand.u32 %v1138, 4294901760
    %1140 = vmatmul.f32.gmra.mxu0 %v1139
    %v1141 = vpop.f32.mrf.mxu0
    %v1142 = vadd.f32 %v1023, %v1141
    %v1143 = vand.u32 %v614, 4294901760
    %v1144 = vsub.f32 %v614, %v1143
    %v1145 = vand.u32 %v1144, 4294901760
    %1146 = vmatmul.f32.gmra.mxu0 %v1145
    %v1147 = vpop.f32.mrf.mxu0
    %v1148 = vadd.f32 %v1028, %v1147
    %v1149 = vand.u32 %v615, 4294901760
    %v1150 = vsub.f32 %v615, %v1149
    %v1151 = vand.u32 %v1150, 4294901760
    %1152 = vmatmul.f32.gmra.mxu0 %v1151
    %v1153 = vpop.f32.mrf.mxu0
    %v1154 = vadd.f32 %v1033, %v1153
    %v1155 = vand.u32 %v616, 4294901760
    %v1156 = vsub.f32 %v616, %v1155
    %v1157 = vand.u32 %v1156, 4294901760
    %1158 = vmatmul.f32.gmra.mxu0 %v1157
    %v1159 = vpop.f32.mrf.mxu0
    %v1160 = vadd.f32 %v1038, %v1159
    %v1161 = vand.u32 %v617, 4294901760
    %v1162 = vsub.f32 %v617, %v1161
    %v1163 = vand.u32 %v1162, 4294901760
    %1164 = vmatmul.f32.gmra.mxu0 %v1163
    %v1165 = vpop.f32.mrf.mxu0
    %v1166 = vadd.f32 %v1043, %v1165
    %v1167 = vand.u32 %v618, 4294901760
    %v1168 = vsub.f32 %v618, %v1167
    %v1169 = vand.u32 %v1168, 4294901760
    %1170 = vmatmul.f32.gmra.mxu0 %v1169
    %v1171 = vpop.f32.mrf.mxu0
    %v1172 = vadd.f32 %v1048, %v1171
    %v1173 = vand.u32 %v619, 4294901760
    %v1174 = vsub.f32 %v619, %v1173
    %v1175 = vand.u32 %v1174, 4294901760
    %1176 = vmatmul.f32.gmra.mxu0 %v1175
    %v1177 = vpop.f32.mrf.mxu0
    %v1178 = vadd.f32 %v1053, %v1177
    %v1179 = vand.u32 %v620, 4294901760
    %v1180 = vsub.f32 %v620, %v1179
    %v1181 = vand.u32 %v1180, 4294901760
    %1182 = vmatmul.f32.gmra.mxu0 %v1181
    %v1183 = vpop.f32.mrf.mxu0
    %v1184 = vadd.f32 %v1058, %v1183
    %v1185 = vand.u32 %v621, 4294901760
    %v1186 = vsub.f32 %v621, %v1185
    %v1187 = vand.u32 %v1186, 4294901760
    %1188 = vmatmul.f32.gmra.mxu0 %v1187
    %v1189 = vpop.f32.mrf.mxu0
    %v1190 = vadd.f32 %v1063, %v1189
    %v1191 = vand.u32 %v622, 4294901760
    %v1192 = vsub.f32 %v622, %v1191
    %v1193 = vand.u32 %v1192, 4294901760
    %1194 = vmatmul.f32.gmra.mxu0 %v1193
    %v1195 = vpop.f32.mrf.mxu0
    %v1196 = vadd.f32 %v1068, %v1195
    %v1197 = vand.u32 %v623, 4294901760
    %v1198 = vsub.f32 %v623, %v1197
    %v1199 = vand.u32 %v1198, 4294901760
    %1200 = vmatmul.f32.gmra.mxu0 %v1199
    %v1201 = vpop.f32.mrf.mxu0
    %v1202 = vadd.f32 %v1073, %v1201
    %1203 = vdwg.mxu0
    %v1204 = vand.u32 %v607, 4294901760
    %v1205 = vsub.f32 %v607, %v1204
    %v1206 = vand.u32 %v1205, 4294901760
    %1207 = vmatpush.msra.mxu0 %v1206
    %v1208 = vand.u32 %v606, 4294901760
    %v1209 = vsub.f32 %v606, %v1208
    %v1210 = vand.u32 %v1209, 4294901760
    %1211 = vmatpush.msra.mxu0 %v1210
    %v1212 = vand.u32 %v605, 4294901760
    %v1213 = vsub.f32 %v605, %v1212
    %v1214 = vand.u32 %v1213, 4294901760
    %1215 = vmatpush.msra.mxu0 %v1214
    %v1216 = vand.u32 %v604, 4294901760
    %v1217 = vsub.f32 %v604, %v1216
    %v1218 = vand.u32 %v1217, 4294901760
    %1219 = vmatpush.msra.mxu0 %v1218
    %v1220 = vand.u32 %v603, 4294901760
    %v1221 = vsub.f32 %v603, %v1220
    %v1222 = vand.u32 %v1221, 4294901760
    %1223 = vmatpush.msra.mxu0 %v1222
    %v1224 = vand.u32 %v602, 4294901760
    %v1225 = vsub.f32 %v602, %v1224
    %v1226 = vand.u32 %v1225, 4294901760
    %1227 = vmatpush.msra.mxu0 %v1226
    %v1228 = vand.u32 %v601, 4294901760
    %v1229 = vsub.f32 %v601, %v1228
    %v1230 = vand.u32 %v1229, 4294901760
    %1231 = vmatpush.msra.mxu0 %v1230
    %v1232 = vand.u32 %v600, 4294901760
    %v1233 = vsub.f32 %v600, %v1232
    %v1234 = vand.u32 %v1233, 4294901760
    %1235 = vmatpush.msra.mxu0 %v1234
    %v1236 = vand.u32 %v599, 4294901760
    %v1237 = vsub.f32 %v599, %v1236
    %v1238 = vand.u32 %v1237, 4294901760
    %1239 = vmatpush.msra.mxu0 %v1238
    %v1240 = vand.u32 %v598, 4294901760
    %v1241 = vsub.f32 %v598, %v1240
    %v1242 = vand.u32 %v1241, 4294901760
    %1243 = vmatpush.msra.mxu0 %v1242
    %v1244 = vand.u32 %v597, 4294901760
    %v1245 = vsub.f32 %v597, %v1244
    %v1246 = vand.u32 %v1245, 4294901760
    %1247 = vmatpush.msra.mxu0 %v1246
    %v1248 = vand.u32 %v596, 4294901760
    %v1249 = vsub.f32 %v596, %v1248
    %v1250 = vand.u32 %v1249, 4294901760
    %1251 = vmatpush.msra.mxu0 %v1250
    %v1252 = vand.u32 %v595, 4294901760
    %v1253 = vsub.f32 %v595, %v1252
    %v1254 = vand.u32 %v1253, 4294901760
    %1255 = vmatpush.msra.mxu0 %v1254
    %v1256 = vand.u32 %v594, 4294901760
    %v1257 = vsub.f32 %v594, %v1256
    %v1258 = vand.u32 %v1257, 4294901760
    %1259 = vmatpush.msra.mxu0 %v1258
    %v1260 = vand.u32 %v593, 4294901760
    %v1261 = vsub.f32 %v593, %v1260
    %v1262 = vand.u32 %v1261, 4294901760
    %1263 = vmatpush.msra.mxu0 %v1262
    %v1264 = vand.u32 %v592, 4294901760
    %v1265 = vsub.f32 %v592, %v1264
    %v1266 = vand.u32 %v1265, 4294901760
    %1267 = vmatpush.msra.mxu0 %v1266
    %v1268 = vand.u32 %v608, 4294901760
    %1269 = vmatmul.f32.gmra.mxu0 %v1268
    %v1270 = vpop.f32.mrf.mxu0
    %v1271 = vadd.f32 %v1112, %v1270
    %v1272 = vand.u32 %v609, 4294901760
    %1273 = vmatmul.f32.gmra.mxu0 %v1272
    %v1274 = vpop.f32.mrf.mxu0
    %v1275 = vadd.f32 %v1118, %v1274
    %v1276 = vand.u32 %v610, 4294901760
    %1277 = vmatmul.f32.gmra.mxu0 %v1276
    %v1278 = vpop.f32.mrf.mxu0
    %v1279 = vadd.f32 %v1124, %v1278
    %v1280 = vand.u32 %v611, 4294901760
    %1281 = vmatmul.f32.gmra.mxu0 %v1280
    %v1282 = vpop.f32.mrf.mxu0
    %v1283 = vadd.f32 %v1130, %v1282
    %v1284 = vand.u32 %v612, 4294901760
    %1285 = vmatmul.f32.gmra.mxu0 %v1284
    %v1286 = vpop.f32.mrf.mxu0
    %v1287 = vadd.f32 %v1136, %v1286
    %v1288 = vand.u32 %v613, 4294901760
    %1289 = vmatmul.f32.gmra.mxu0 %v1288
    %v1290 = vpop.f32.mrf.mxu0
    %v1291 = vadd.f32 %v1142, %v1290
    %v1292 = vand.u32 %v614, 4294901760
    %1293 = vmatmul.f32.gmra.mxu0 %v1292
    %v1294 = vpop.f32.mrf.mxu0
    %v1295 = vadd.f32 %v1148, %v1294
    %v1296 = vand.u32 %v615, 4294901760
    %1297 = vmatmul.f32.gmra.mxu0 %v1296
    %v1298 = vpop.f32.mrf.mxu0
    %v1299 = vadd.f32 %v1154, %v1298
    %v1300 = vand.u32 %v616, 4294901760
    %1301 = vmatmul.f32.gmra.mxu0 %v1300
    %v1302 = vpop.f32.mrf.mxu0
    %v1303 = vadd.f32 %v1160, %v1302
    %v1304 = vand.u32 %v617, 4294901760
    %1305 = vmatmul.f32.gmra.mxu0 %v1304
    %v1306 = vpop.f32.mrf.mxu0
    %v1307 = vadd.f32 %v1166, %v1306
    %v1308 = vand.u32 %v618, 4294901760
    %1309 = vmatmul.f32.gmra.mxu0 %v1308
    %v1310 = vpop.f32.mrf.mxu0
    %v1311 = vadd.f32 %v1172, %v1310
    %v1312 = vand.u32 %v619, 4294901760
    %1313 = vmatmul.f32.gmra.mxu0 %v1312
    %v1314 = vpop.f32.mrf.mxu0
    %v1315 = vadd.f32 %v1178, %v1314
    %v1316 = vand.u32 %v620, 4294901760
    %1317 = vmatmul.f32.gmra.mxu0 %v1316
    %v1318 = vpop.f32.mrf.mxu0
    %v1319 = vadd.f32 %v1184, %v1318
    %v1320 = vand.u32 %v621, 4294901760
    %1321 = vmatmul.f32.gmra.mxu0 %v1320
    %v1322 = vpop.f32.mrf.mxu0
    %v1323 = vadd.f32 %v1190, %v1322
    %v1324 = vand.u32 %v622, 4294901760
    %1325 = vmatmul.f32.gmra.mxu0 %v1324
    %v1326 = vpop.f32.mrf.mxu0
    %v1327 = vadd.f32 %v1196, %v1326
    %v1328 = vand.u32 %v623, 4294901760
    %1329 = vmatmul.f32.gmra.mxu0 %v1328
    %v1330 = vpop.f32.mrf.mxu0
    %v1331 = vadd.f32 %v1202, %v1330
    %1332 = vdwg.mxu0
    %v1333 = vand.u32 %v607, 4294901760
    %1334 = vmatpush.msra.mxu0 %v1333
    %v1335 = vand.u32 %v606, 4294901760
    %1336 = vmatpush.msra.mxu0 %v1335
    %v1337 = vand.u32 %v605, 4294901760
    %1338 = vmatpush.msra.mxu0 %v1337
    %v1339 = vand.u32 %v604, 4294901760
    %1340 = vmatpush.msra.mxu0 %v1339
    %v1341 = vand.u32 %v603, 4294901760
    %1342 = vmatpush.msra.mxu0 %v1341
    %v1343 = vand.u32 %v602, 4294901760
    %1344 = vmatpush.msra.mxu0 %v1343
    %v1345 = vand.u32 %v601, 4294901760
    %1346 = vmatpush.msra.mxu0 %v1345
    %v1347 = vand.u32 %v600, 4294901760
    %1348 = vmatpush.msra.mxu0 %v1347
    %v1349 = vand.u32 %v599, 4294901760
    %1350 = vmatpush.msra.mxu0 %v1349
    %v1351 = vand.u32 %v598, 4294901760
    %1352 = vmatpush.msra.mxu0 %v1351
    %v1353 = vand.u32 %v597, 4294901760
    %1354 = vmatpush.msra.mxu0 %v1353
    %v1355 = vand.u32 %v596, 4294901760
    %1356 = vmatpush.msra.mxu0 %v1355
    %v1357 = vand.u32 %v595, 4294901760
    %1358 = vmatpush.msra.mxu0 %v1357
    %v1359 = vand.u32 %v594, 4294901760
    %1360 = vmatpush.msra.mxu0 %v1359
    %v1361 = vand.u32 %v593, 4294901760
    %1362 = vmatpush.msra.mxu0 %v1361
    %v1363 = vand.u32 %v592, 4294901760
    %1364 = vmatpush.msra.mxu0 %v1363
    %v1365 = vand.u32 %v608, 4294901760
    %1366 = vmatmul.f32.gmra.mxu0 %v1365
    %v1367 = vpop.f32.mrf.mxu0
    %v1368 = vadd.f32 %v1271, %v1367
    %v1369 = vand.u32 %v609, 4294901760
    %1370 = vmatmul.f32.gmra.mxu0 %v1369
    %v1371 = vpop.f32.mrf.mxu0
    %v1372 = vadd.f32 %v1275, %v1371
    %v1373 = vand.u32 %v610, 4294901760
    %1374 = vmatmul.f32.gmra.mxu0 %v1373
    %v1375 = vpop.f32.mrf.mxu0
    %v1376 = vadd.f32 %v1279, %v1375
    %v1377 = vand.u32 %v611, 4294901760
    %1378 = vmatmul.f32.gmra.mxu0 %v1377
    %v1379 = vpop.f32.mrf.mxu0
    %v1380 = vadd.f32 %v1283, %v1379
    %v1381 = vand.u32 %v612, 4294901760
    %1382 = vmatmul.f32.gmra.mxu0 %v1381
    %v1383 = vpop.f32.mrf.mxu0
    %v1384 = vadd.f32 %v1287, %v1383
    %v1385 = vand.u32 %v613, 4294901760
    %1386 = vmatmul.f32.gmra.mxu0 %v1385
    %v1387 = vpop.f32.mrf.mxu0
    %v1388 = vadd.f32 %v1291, %v1387
    %v1389 = vand.u32 %v614, 4294901760
    %1390 = vmatmul.f32.gmra.mxu0 %v1389
    %v1391 = vpop.f32.mrf.mxu0
    %v1392 = vadd.f32 %v1295, %v1391
    %v1393 = vand.u32 %v615, 4294901760
    %1394 = vmatmul.f32.gmra.mxu0 %v1393
    %v1395 = vpop.f32.mrf.mxu0
    %v1396 = vadd.f32 %v1299, %v1395
    %v1397 = vand.u32 %v616, 4294901760
    %1398 = vmatmul.f32.gmra.mxu0 %v1397
    %v1399 = vpop.f32.mrf.mxu0
    %v1400 = vadd.f32 %v1303, %v1399
    %v1401 = vand.u32 %v617, 4294901760
    %1402 = vmatmul.f32.gmra.mxu0 %v1401
    %v1403 = vpop.f32.mrf.mxu0
    %v1404 = vadd.f32 %v1307, %v1403
    %v1405 = vand.u32 %v618, 4294901760
    %1406 = vmatmul.f32.gmra.mxu0 %v1405
    %v1407 = vpop.f32.mrf.mxu0
    %v1408 = vadd.f32 %v1311, %v1407
    %v1409 = vand.u32 %v619, 4294901760
    %1410 = vmatmul.f32.gmra.mxu0 %v1409
    %v1411 = vpop.f32.mrf.mxu0
    %v1412 = vadd.f32 %v1315, %v1411
    %v1413 = vand.u32 %v620, 4294901760
    %1414 = vmatmul.f32.gmra.mxu0 %v1413
    %v1415 = vpop.f32.mrf.mxu0
    %v1416 = vadd.f32 %v1319, %v1415
    %v1417 = vand.u32 %v621, 4294901760
    %1418 = vmatmul.f32.gmra.mxu0 %v1417
    %v1419 = vpop.f32.mrf.mxu0
    %v1420 = vadd.f32 %v1323, %v1419
    %v1421 = vand.u32 %v622, 4294901760
    %1422 = vmatmul.f32.gmra.mxu0 %v1421
    %v1423 = vpop.f32.mrf.mxu0
    %v1424 = vadd.f32 %v1327, %v1423
    %v1425 = vand.u32 %v623, 4294901760
    %1426 = vmatmul.f32.gmra.mxu0 %v1425
    %v1427 = vpop.f32.mrf.mxu0
    %v1428 = vadd.f32 %v1331, %v1427
    %1429 = vdwg.mxu0
    %v1430 = vlog2.pop %v1368
    %v1431 = vmul.f32 %v1430, 0.6931472
    %v1432 = vlog2.pop %v1372
    %v1433 = vmul.f32 %v1432, 0.6931472
    %v1434 = vlog2.pop %v1376
    %v1435 = vmul.f32 %v1434, 0.6931472
    %v1436 = vlog2.pop %v1380
    %v1437 = vmul.f32 %v1436, 0.6931472
    %v1438 = vlog2.pop %v1384
    %v1439 = vmul.f32 %v1438, 0.6931472
    %v1440 = vlog2.pop %v1388
    %v1441 = vmul.f32 %v1440, 0.6931472
    %v1442 = vlog2.pop %v1392
    %v1443 = vmul.f32 %v1442, 0.6931472
    %v1444 = vlog2.pop %v1396
    %v1445 = vmul.f32 %v1444, 0.6931472
    %v1446 = vlog2.pop %v1400
    %v1447 = vmul.f32 %v1446, 0.6931472
    %v1448 = vlog2.pop %v1404
    %v1449 = vmul.f32 %v1448, 0.6931472
    %v1450 = vlog2.pop %v1408
    %v1451 = vmul.f32 %v1450, 0.6931472
    %v1452 = vlog2.pop %v1412
    %v1453 = vmul.f32 %v1452, 0.6931472
    %v1454 = vlog2.pop %v1416
    %v1455 = vmul.f32 %v1454, 0.6931472
    %v1456 = vlog2.pop %v1420
    %v1457 = vmul.f32 %v1456, 0.6931472
    %v1458 = vlog2.pop %v1424
    %v1459 = vmul.f32 %v1458, 0.6931472
    %v1460 = vlog2.pop %v1428
    %v1461 = vmul.f32 %v1460, 0.6931472
    %1462 = vst [vmem:[#allocation8] sm:$0xff] %v1431
    %1463 = vst [vmem:[#allocation8 + $0x8] sm:$0xff] %v1433
    %1464 = vst [vmem:[#allocation8 + $0x10] sm:$0xff] %v1435
    %1465 = vst [vmem:[#allocation8 + $0x18] sm:$0xff] %v1437
    %1466 = vst [vmem:[#allocation8 + $0x20] sm:$0xff] %v1439
    %1467 = vst [vmem:[#allocation8 + $0x28] sm:$0xff] %v1441
    %1468 = vst [vmem:[#allocation8 + $0x30] sm:$0xff] %v1443
    %1469 = vst [vmem:[#allocation8 + $0x38] sm:$0xff] %v1445
    %1470 = vst [vmem:[#allocation8 + $0x40] sm:$0xff] %v1447
    %1471 = vst [vmem:[#allocation8 + $0x48] sm:$0xff] %v1449
    %1472 = vst [vmem:[#allocation8 + $0x50] sm:$0xff] %v1451
    %1473 = vst [vmem:[#allocation8 + $0x58] sm:$0xff] %v1453
    %1474 = vst [vmem:[#allocation8 + $0x60] sm:$0xff] %v1455
    %1475 = vst [vmem:[#allocation8 + $0x68] sm:$0xff] %v1457
    %1476 = vst [vmem:[#allocation8 + $0x70] sm:$0xff] %v1459
    %1477 = vst [vmem:[#allocation8 + $0x78] sm:$0xff] %v1461
    // Predicated region
    $region26: #{tpu_custom_call.1} parent=1 // pred_check
      _
    $region27: #{tpu_custom_call.1} parent=1 // pred_check_branch
      %1479 = sbr.rel (0) target = $region29
    $region28: #{tpu_custom_call.1} parent=1 // pred_region
      %1481 = vsyncadd [#allocation4], 0
      %s1482 = sshll.u32 [#allocation8], 4
      %s1483 = int_to_ptr.vmem [resolvable:$true] %s1482
      %s1484 = sshll.u32 %s3, 4
      %s1485 = int_to_ptr.hbm [resolvable:$true] %s1484
      %1490 = dma.vmem_to_hbm [thread:$0]  %s1483, 2048, %s1485, [#allocation4], 128, 128, 8
    $region29: #{tpu_custom_call.1} parent=1 // pred_fallthru
      _
    // Predicated region
    $region30: #{tpu_custom_call.1} parent=1 // pred_check
      _
    $region31: #{tpu_custom_call.1} parent=1 // pred_check_branch
      %1492 = sbr.rel (0) target = $region33
    $region32: #{tpu_custom_call.1} parent=1 // pred_region
      %1494 = dma.done [#allocation4], 2048
    $region33: #{tpu_custom_call.1} parent=1 // pred_fallthru
      _
    %1495 = vsyncpa [#allocation3], 1
    %1496 = vsyncpa [#allocation6], 1
    %1497 = vsyncpa [#allocation4], 1

</llo_original>
